<compile_context>
chip_gen: v7x
topology: tpu7x:2x2x1
jax: 0.10.0
libtpu: 0.0.40
codegen_flags: <defaults>
</compile_context>

<pallas_src>
import jax
import jax.numpy as jnp
from jax.experimental import pallas as pl
from jax.experimental.pallas import tpu as pltpu


# ----------------------------- Pallas kernel --------------------------------
def _mlp_kernel(x_ref,
                w1_ref, b1_ref,
                w2_ref, b2_ref,
                w3_ref, b3_ref,
                o_ref):
    # x_ref: (TM_B, F*R) f32 repacked feature tile. Weights bf16, biases f32.
    # Cast to bf16 in-register (no separate host-side convert pass).
    x = x_ref[...].astype(jnp.bfloat16)

    # Layer 1 (embedding contribution folded into b1 on the host).
    h = jnp.dot(x, w1_ref[...], preferred_element_type=jnp.float32)
    h = jnp.maximum(h + b1_ref[...], 0.0)                       # ReLU (f32)

    # Layer 2
    h = jnp.dot(h.astype(jnp.bfloat16), w2_ref[...],
                preferred_element_type=jnp.float32)
    h = jnp.maximum(h + b2_ref[...], 0.0)                       # ReLU (f32)

    # Layer 3 + Sigmoid
    out = jnp.dot(h.astype(jnp.bfloat16), w3_ref[...],
                  preferred_element_type=jnp.float32) + b3_ref[...]
    o_ref[...] = jax.nn.sigmoid(out).astype(o_ref.dtype)


def _round_up(x, m):
    return ((x + m - 1) // m) * m


def _default_replication():
    # 256x256 MXU on v6e/v7x -> replicate 4x; 128-wide MXU on v5e -> 2x.
    try:
        kind = jax.devices()[0].device_kind.lower()
        if "v5" in kind or "v4" in kind:
            return 2
    except Exception:
        pass
    return 4


def appearance_mlp_forward(gaussian_features, appearance, view_dirs, params,
                           *, tm=4096, replication=None):
    """Forward pass of Model (is_view_dependent=False, normalize=False)."""
    del view_dirs  # unused for the default (non view-dependent) config
    N, F = gaussian_features.shape
    H = params["w2"].shape[0]
    R = _default_replication() if replication is None else replication

    # A single appearance index per call (matches the PyTorch module, which
    # repeats one embedding row across all gaussians).
    app_idx = appearance.reshape((-1,))
    assert app_idx.shape[0] == 1, "expected a single appearance id per call"
    emb_row = params["embedding"][app_idx[0]][None, :].astype(jnp.float32)   # (1, E)

    # Split W1 (F+E, H): fold the constant embedding term into the bias.
    w1a = params["w1"][:F, :].astype(jnp.float32)                            # (F, H)
    w1b = params["w1"][F:, :].astype(jnp.float32)                            # (E, H)
    b1_eff = (emb_row @ w1b + params["b1"]).astype(jnp.float32)              # (1, H)

    # Block-diagonal "batch by R" repack of the weights (kron(I_R, W)) so each
    # MXU pass processes R rows of the original problem.  Tiny host-side cost.
    eye_r = jnp.eye(R, dtype=jnp.float32)
    w1_bd = jnp.kron(eye_r, w1a).astype(jnp.bfloat16)                        # (F*R, H*R)
    w2_bd = jnp.kron(eye_r, params["w2"].astype(jnp.float32)).astype(jnp.bfloat16)
    w3_bd = jnp.kron(eye_r, params["w3"].astype(jnp.float32)).astype(jnp.bfloat16)
    b1_t = jnp.tile(b1_eff, (1, R))                                          # (1, H*R)
    b2_t = jnp.tile(params["b2"].astype(jnp.float32), (1, R))                # (1, H*R)
    b3_t = jnp.tile(params["b3"].astype(jnp.float32), (1, R))                # (1, 3*R)

    # Pad N up to a multiple of R (padded rows are discarded), then the
    # (N,F)->(N/R, F*R) reshape is a free contiguous bitcast.
    Np = _round_up(N, R)
    x = gaussian_features.astype(jnp.float32)
    if Np != N:
        x = jnp.pad(x, ((0, Np - N), (0, 0)))
    M = Np // R
    x2 = x.reshape(M, F * R)

    # Tile size in repacked rows: large to amortize per-step overhead, but
    # capped so there are >=2 grid steps (keeps both v7x TensorCores busy).
    tm_b = max(8, tm // R)
    tm_b = max(8, min(tm_b, _round_up(-(-M // 2), 8)))
    grid = (pl.cdiv(M, tm_b),)
    full = lambda shape: pl.BlockSpec(shape, lambda i: (0, 0))

    out = pl.pallas_call(
        _mlp_kernel,
        out_shape=jax.ShapeDtypeStruct((M, 3 * R), gaussian_features.dtype),
        grid_spec=pltpu.PrefetchScalarGridSpec(
            num_scalar_prefetch=0,
            grid=grid,
            in_specs=[
                pl.BlockSpec((tm_b, F * R), lambda i: (i, 0)),   # feature tile
                full((F * R, H * R)), full((1, H * R)),          # layer 1
                full((H * R, H * R)), full((1, H * R)),          # layer 2
                full((H * R, 3 * R)), full((1, 3 * R)),          # layer 3
            ],
            out_specs=pl.BlockSpec((tm_b, 3 * R), lambda i: (i, 0)),
        ),
        compiler_params=pltpu.CompilerParams(
            dimension_semantics=("parallel",),
        ),
    )(x2,
      w1_bd, b1_t,
      w2_bd, b2_t,
      w3_bd, b3_t)

    # Undo the block-diagonal repack: (M, 3R) -> (Np, 3) -> (N, 3).
    return out.reshape(Np, 3)[:N]


# --------------------------- parameter construction -------------------------
def init_params(key, *, n_appearances=8, n_gaussian_feature_dims=64,
                n_appearance_embedding_dims=32, n_neurons=64):
    F, E, H = n_gaussian_feature_dims, n_appearance_embedding_dims, n_neurons
    n_in = F + E
    ks = jax.random.split(key, 8)

    def linear(kw, kb, fan_in, fan_out):
        # PyTorch nn.Linear-style uniform init, deterministic per key.
        bound = 1.0 / jnp.sqrt(fan_in)
        w = jax.random.uniform(kw, (fan_in, fan_out), jnp.float32, -bound, bound)
        b = jax.random.uniform(kb, (1, fan_out), jnp.float32, -bound, bound)
        return w, b

    w1, b1 = linear(ks[0], ks[1], n_in, H)
    w2, b2 = linear(ks[2], ks[3], H, H)
    w3, b3 = linear(ks[4], ks[5], H, 3)
    embedding = jax.random.normal(ks[6], (n_appearances, E), jnp.float32)
    return {"embedding": embedding,
            "w1": w1, "b1": b1, "w2": w2, "b2": b2, "w3": w3, "b3": b3}


# ------------------------------ pure-JAX reference ---------------------------
def reference_forward(gaussian_features, appearance, params):
    emb = params["embedding"][appearance.reshape((-1,))]                 # (1, E)
    emb = jnp.broadcast_to(emb, (gaussian_features.shape[0], emb.shape[1]))
    x = jnp.concatenate([gaussian_features, emb], axis=-1)
    h = jnp.maximum(x @ params["w1"] + params["b1"], 0.0)
    h = jnp.maximum(h @ params["w2"] + params["b2"], 0.0)
    return jax.nn.sigmoid(h @ params["w3"] + params["b3"])


# ------------------------------------ main -----------------------------------
if __name__ == "__main__":
    key = jax.random.PRNGKey(0)
    k_feat, k_params, k_feat2 = jax.random.split(key, 3)

    F, E, H = 64, 32, 64         # config defaults
    n_appearances = 8

    params = init_params(k_params, n_appearances=n_appearances,
                         n_gaussian_feature_dims=F,
                         n_appearance_embedding_dims=E, n_neurons=H)

    appearance = jnp.array([3], dtype=jnp.int32)      # single appearance index

    # Case 1: N a multiple of R and of the tile (2-step grid on all gens).
    N1 = 4096
    feats1 = jax.random.normal(k_feat, (N1, F), jnp.float32)
    view_dirs1 = jnp.zeros((N1, 3), jnp.float32)      # unused (not view-dependent)
    out1 = appearance_mlp_forward(feats1, appearance, view_dirs1, params)
    out1 = jax.block_until_ready(out1)
    ref1 = reference_forward(feats1, appearance, params)
    assert out1.shape == (N1, 3)
    assert jnp.max(jnp.abs(out1 - ref1)) < 2e-2       # bf16 matmul tolerance

    # Case 2: ragged N (not a multiple of R nor of the tile) exercises both
    # the host-side pad and the clipped last grid block.
    N2 = 999
    feats2 = jax.random.normal(k_feat2, (N2, F), jnp.float32)
    view_dirs2 = jnp.zeros((N2, 3), jnp.float32)
    out2 = appearance_mlp_forward(feats2, appearance, view_dirs2, params)
    out2 = jax.block_until_ready(out2)
    ref2 = reference_forward(feats2, appearance, params)
    assert out2.shape == (N2, 3)
    assert jnp.max(jnp.abs(out2 - ref2)) < 2e-2

    print("KERNEL_OK")
</pallas_src>

<mosaic_0001>
module attributes {stable_mosaic.version = 11 : i64} {
  func.func @_mlp_kernel(%arg0: i32, %arg1: memref<512x256xf32, #tpu.memory_space<vmem>>, %arg2: memref<256x256xbf16, #tpu.memory_space<vmem>>, %arg3: memref<1x256xf32, #tpu.memory_space<vmem>>, %arg4: memref<256x256xbf16, #tpu.memory_space<vmem>>, %arg5: memref<1x256xf32, #tpu.memory_space<vmem>>, %arg6: memref<256x12xbf16, #tpu.memory_space<vmem>>, %arg7: memref<1x12xf32, #tpu.memory_space<vmem>>, %arg8: memref<512x12xf32, #tpu.memory_space<vmem>>) attributes {dimension_semantics = [#tpu.dimension_semantics<parallel>], iteration_bounds = array<i64: 2>, scalar_prefetch = 0 : i64, scratch_operands = 0 : i64, tpu.core_type = #tpu.core_type<tc>, window_params = [{transform_indices = @transform_0, window_bounds = array<i64: 512, 256>}, {pipeline_mode = #tpu.pipeline_mode<synchronous>, transform_indices = @transform_1, window_bounds = array<i64: 256, 256>}, {pipeline_mode = #tpu.pipeline_mode<synchronous>, transform_indices = @transform_2, window_bounds = array<i64: 1, 256>}, {pipeline_mode = #tpu.pipeline_mode<synchronous>, transform_indices = @transform_3, window_bounds = array<i64: 256, 256>}, {pipeline_mode = #tpu.pipeline_mode<synchronous>, transform_indices = @transform_4, window_bounds = array<i64: 1, 256>}, {pipeline_mode = #tpu.pipeline_mode<synchronous>, transform_indices = @transform_5, window_bounds = array<i64: 256, 12>}, {pipeline_mode = #tpu.pipeline_mode<synchronous>, transform_indices = @transform_6, window_bounds = array<i64: 1, 12>}, {transform_indices = @transform_7, window_bounds = array<i64: 512, 12>}]} {
    %c0 = arith.constant 0 : index
    %c0_0 = arith.constant 0 : index
    %0 = vector.load %arg1[%c0, %c0_0] : memref<512x256xf32, #tpu.memory_space<vmem>>, vector<512x256xf32>
    %1 = arith.truncf %0 : vector<512x256xf32> to vector<512x256xbf16>
    %c0_1 = arith.constant 0 : index
    %c0_2 = arith.constant 0 : index
    %2 = vector.load %arg2[%c0_1, %c0_2] : memref<256x256xbf16, #tpu.memory_space<vmem>>, vector<256x256xbf16>
    %cst = arith.constant dense<0.000000e+00> : vector<512x256xf32>
    %3 = tpu.matmul %1, %2, %cst {dimension_numbers = #tpu.dot_dimension_numbers<[1], [0], [0], [1], [0, 0, 1, 1], [], []>} : vector<512x256xbf16>, vector<256x256xbf16>, vector<512x256xf32> -> vector<512x256xf32>
    %c0_3 = arith.constant 0 : index
    %c0_4 = arith.constant 0 : index
    %4 = vector.load %arg3[%c0_3, %c0_4] : memref<1x256xf32, #tpu.memory_space<vmem>>, vector<1x256xf32>
    %5 = vector.broadcast %4 : vector<1x256xf32> to vector<512x256xf32>
    %6 = arith.addf %3, %5 : vector<512x256xf32>
    %cst_5 = arith.constant 0.000000e+00 : f32
    %7 = vector.broadcast %cst_5 : f32 to vector<512x256xf32>
    %8 = arith.maximumf %6, %7 : vector<512x256xf32>
    %9 = arith.truncf %8 : vector<512x256xf32> to vector<512x256xbf16>
    %c0_6 = arith.constant 0 : index
    %c0_7 = arith.constant 0 : index
    %10 = vector.load %arg4[%c0_6, %c0_7] : memref<256x256xbf16, #tpu.memory_space<vmem>>, vector<256x256xbf16>
    %cst_8 = arith.constant dense<0.000000e+00> : vector<512x256xf32>
    %11 = tpu.matmul %9, %10, %cst_8 {dimension_numbers = #tpu.dot_dimension_numbers<[1], [0], [0], [1], [0, 0, 1, 1], [], []>} : vector<512x256xbf16>, vector<256x256xbf16>, vector<512x256xf32> -> vector<512x256xf32>
    %c0_9 = arith.constant 0 : index
    %c0_10 = arith.constant 0 : index
    %12 = vector.load %arg5[%c0_9, %c0_10] : memref<1x256xf32, #tpu.memory_space<vmem>>, vector<1x256xf32>
    %13 = vector.broadcast %12 : vector<1x256xf32> to vector<512x256xf32>
    %14 = arith.addf %11, %13 : vector<512x256xf32>
    %cst_11 = arith.constant 0.000000e+00 : f32
    %15 = vector.broadcast %cst_11 : f32 to vector<512x256xf32>
    %16 = arith.maximumf %14, %15 : vector<512x256xf32>
    %17 = arith.truncf %16 : vector<512x256xf32> to vector<512x256xbf16>
    %c0_12 = arith.constant 0 : index
    %c0_13 = arith.constant 0 : index
    %18 = vector.load %arg6[%c0_12, %c0_13] : memref<256x12xbf16, #tpu.memory_space<vmem>>, vector<256x12xbf16>
    %cst_14 = arith.constant dense<0.000000e+00> : vector<512x12xf32>
    %19 = tpu.matmul %17, %18, %cst_14 {dimension_numbers = #tpu.dot_dimension_numbers<[1], [0], [0], [1], [0, 0, 1, 1], [], []>} : vector<512x256xbf16>, vector<256x12xbf16>, vector<512x12xf32> -> vector<512x12xf32>
    %c0_15 = arith.constant 0 : index
    %c0_16 = arith.constant 0 : index
    %20 = vector.load %arg7[%c0_15, %c0_16] : memref<1x12xf32, #tpu.memory_space<vmem>>, vector<1x12xf32>
    %21 = vector.broadcast %20 : vector<1x12xf32> to vector<512x12xf32>
    %22 = arith.addf %19, %21 : vector<512x12xf32>
    %23 = arith.negf %22 : vector<512x12xf32>
    %24 = math.exp %23 : vector<512x12xf32>
    %cst_17 = arith.constant 1.000000e+00 : f32
    %25 = vector.broadcast %cst_17 : f32 to vector<512x12xf32>
    %26 = arith.addf %25, %24 : vector<512x12xf32>
    %27 = arith.divf %25, %26 : vector<512x12xf32>
    %c0_18 = arith.constant 0 : index
    %c0_19 = arith.constant 0 : index
    %28 = vector.load %arg8[%c0_18, %c0_19] : memref<512x12xf32, #tpu.memory_space<vmem>>, vector<512x12xf32>
    tpu.vector_store %arg8[%c0_18, %c0_19], %27 {strides = array<i32>} : memref<512x12xf32, #tpu.memory_space<vmem>>, vector<512x12xf32>,
    return
  }
  func.func @transform_0(%arg0: i32) -> (i32, i32) {
    %c0_i32 = arith.constant 0 : i32
    %c0_i32_0 = arith.constant 0 : i32
    return %arg0, %c0_i32 : i32, i32
  }
  func.func @transform_1(%arg0: i32) -> (i32, i32) {
    %c0_i32 = arith.constant 0 : i32
    %c0_i32_0 = arith.constant 0 : i32
    %c0_i32_1 = arith.constant 0 : i32
    return %c0_i32, %c0_i32_0 : i32, i32
  }
  func.func @transform_2(%arg0: i32) -> (i32, i32) {
    %c0_i32 = arith.constant 0 : i32
    %c0_i32_0 = arith.constant 0 : i32
    %c0_i32_1 = arith.constant 0 : i32
    return %c0_i32, %c0_i32_0 : i32, i32
  }
  func.func @transform_3(%arg0: i32) -> (i32, i32) {
    %c0_i32 = arith.constant 0 : i32
    %c0_i32_0 = arith.constant 0 : i32
    %c0_i32_1 = arith.constant 0 : i32
    return %c0_i32, %c0_i32_0 : i32, i32
  }
  func.func @transform_4(%arg0: i32) -> (i32, i32) {
    %c0_i32 = arith.constant 0 : i32
    %c0_i32_0 = arith.constant 0 : i32
    %c0_i32_1 = arith.constant 0 : i32
    return %c0_i32, %c0_i32_0 : i32, i32
  }
  func.func @transform_5(%arg0: i32) -> (i32, i32) {
    %c0_i32 = arith.constant 0 : i32
    %c0_i32_0 = arith.constant 0 : i32
    %c0_i32_1 = arith.constant 0 : i32
    return %c0_i32, %c0_i32_0 : i32, i32
  }
  func.func @transform_6(%arg0: i32) -> (i32, i32) {
    %c0_i32 = arith.constant 0 : i32
    %c0_i32_0 = arith.constant 0 : i32
    %c0_i32_1 = arith.constant 0 : i32
    return %c0_i32, %c0_i32_0 : i32, i32
  }
  func.func @transform_7(%arg0: i32) -> (i32, i32) {
    %c0_i32 = arith.constant 0 : i32
    %c0_i32_0 = arith.constant 0 : i32
    return %arg0, %c0_i32 : i32, i32
  }
}

</mosaic_0001>

<llo_original>
// kernel: tpu_custom_call.1
$region0: #{tpu_custom_call.1}
  #allocation0 [shape = 'u32[]', space=smem, size = 0x4, offset = 0x4, fixed_abs, tag = 'smem constant byte address 0x4 - core index']
  #allocation1 [shape = 'u32[144,128]{1,0:T(1,128)}', space=vmem, size = 0x12000, scoped, tag = 'internal scratch']
  %s0 = inlined_call_operand.hbm [shape: f32[1024,256], index: 0, kind: input, shape index: {}]
  %s1 = inlined_call_operand.hbm [shape: bf16[256,256], index: 1, kind: input, shape index: {}]
  %s2 = inlined_call_operand.vmem [shape: f32[1,256], index: 2, kind: input, shape index: {}]
  %s3 = inlined_call_operand.hbm [shape: bf16[256,256], index: 3, kind: input, shape index: {}]
  %s4 = inlined_call_operand.vmem [shape: f32[1,256], index: 4, kind: input, shape index: {}]
  %s5 = inlined_call_operand.vmem [shape: bf16[256,12], index: 5, kind: input, shape index: {}]
  %s6 = inlined_call_operand.vmem [shape: f32[1,12], index: 6, kind: input, shape index: {}]
  %s7 = inlined_call_operand.vmem [shape: f32[1024,12], index: 7, kind: output, shape index: {}]
  %s8 = sld [smem:[#allocation0]]
  $region73: #{tpu_custom_call.1} parent=0
    _
  %s10 = ssub.s32 1, %s8
  %s11 = scalar_select 0, %s10, %s8
  $region1: #{tpu_custom_call.1} parent=0
    #allocation2 [shape = 'u8[1048576]{0}', space=vmem, size = 0x100000, scoped, tag = 'input window, operand 0']
    #allocation3 [shape = 's32[2]{0}', space=sflag, size = 0x8, scoped, tag = 'scoped memory for tpu_custom_call.1']
    #allocation4 [shape = 'u8[131072]{0}', space=vmem, size = 0x20000, scoped, tag = 'input window, operand 1, single buffered']
    #allocation5 [shape = 's32[1]{0}', space=sflag, size = 0x4, scoped, tag = 'scoped memory for tpu_custom_call.1']
    #allocation6 [shape = 'u8[131072]{0}', space=vmem, size = 0x20000, scoped, tag = 'input window, operand 3, single buffered']
    %12 = vsyncpa [#allocation3], 0
    %s13 = scalar_lea.sflag [#allocation3], 1
    %14 = vsyncpa %s13, 0
    %15 = vsyncpa [#allocation5], 0
    loop: start=0, step=1, limit=4
    $region2: #{tpu_custom_call.1} parent=1 // loop_pre_header
      _
    $region3: #{tpu_custom_call.1} parent=1 // loop_header
      %s17 = sphi 0, %s21
      %p18 = scmp.ge.s32.totalorder %s17, 4
      %s27 = sphi 0, %s29
      %s30 = sphi 0, %s27
      %s31 = sphi 0, %s30
      %s47 = sphi 0, %s31
      %s51 = sphi 0, %s51
      %s53 = sphi 0, %s51
      %s54 = sphi 0, %s53
      %s68 = sphi 0, %s54
      %s72 = sphi 0, %s72
      %s74 = sphi 0, %s72
      %s75 = sphi 0, %s74
      %s89 = sphi 0, %s75
      %s93 = sphi 0, %s93
      %s95 = sphi 0, %s93
      %s96 = sphi 0, %s95
      %s110 = sphi 0, %s96
      %s114 = sphi 0, %s114
      %s116 = sphi 0, %s114
      %s117 = sphi 0, %s116
      %s131 = sphi 0, %s117
      %s135 = sphi 0, %s135
      %s137 = sphi 0, %s135
      %s138 = sphi 0, %s137
      %s152 = sphi 0, %s138
      %s156 = sphi 0, %s156
      %s158 = sphi 0, %s156
      %s159 = sphi 0, %s158
      %s173 = sphi 0, %s159
      %s179 = sphi 0, %s181
      %s182 = sphi 0, %s179
      %s183 = sphi 0, %s182
      %s199 = sphi 0, %s183
    $region4: #{tpu_custom_call.1} parent=1 // loop_header_branch
      %20 = sbr.rel (%p18) target = $region8
    $region5: #{tpu_custom_call.1} parent=1 // loop_body
      %s22 = ssub.s32 %s17, 1
      %s23 = ssub.s32 %s17, 2
      %s24 = sadd.s32 %s17, 1
      %s25 = ssub.s32 %s17, %s24
      %p26 = scmp.eq.s32.totalorder %s25, 0
      %s28 = sadd.s32 %s27, 1
      %s29 = scalar_select %p26, %s27, %s28
      %p32 = pneg %p26
      %p33 = scmp.eq.s32.totalorder %s17, 1
      %p34 = por %p32, %p33
      %p35 = scmp.ne.s32.totalorder %s27, %s30
      %p36 = scmp.eq.s32.totalorder %s17, 0
      %p37 = por %p35, %p36
      %p38 = scmp.ne.s32.totalorder %s27, %s30
      %p39 = scmp.eq.s32.totalorder %s22, 1
      %p40 = por %p38, %p39
      %p41 = scmp.ne.s32.totalorder %s30, %s31
      %p42 = scmp.eq.s32.totalorder %s22, 0
      %p43 = por %p41, %p42
      %p44 = scmp.ne.s32.totalorder %s30, %s31
      %p45 = scmp.eq.s32.totalorder %s23, 1
      %p46 = por %p44, %p45
      %p48 = scmp.ne.s32.totalorder %s31, %s47
      %p49 = scmp.eq.s32.totalorder %s23, 0
      %p50 = por %p48, %p49
      %s52 = sadd.s32 %s51, 1
      %p55 = scmp.eq.s32.totalorder %s17, 1
      %p56 = scmp.ne.s32.totalorder %s51, %s53
      %p57 = scmp.eq.s32.totalorder %s17, 0
      %p58 = por %p56, %p57
      %p59 = scmp.ne.s32.totalorder %s51, %s53
      %p60 = scmp.eq.s32.totalorder %s22, 1
      %p61 = por %p59, %p60
      %p62 = scmp.ne.s32.totalorder %s53, %s54
      %p63 = scmp.eq.s32.totalorder %s22, 0
      %p64 = por %p62, %p63
      %p65 = scmp.ne.s32.totalorder %s53, %s54
      %p66 = scmp.eq.s32.totalorder %s23, 1
      %p67 = por %p65, %p66
      %p69 = scmp.ne.s32.totalorder %s54, %s68
      %p70 = scmp.eq.s32.totalorder %s23, 0
      %p71 = por %p69, %p70
      %s73 = sadd.s32 %s72, 1
      %p76 = scmp.eq.s32.totalorder %s17, 1
      %p77 = scmp.ne.s32.totalorder %s72, %s74
      %p78 = scmp.eq.s32.totalorder %s17, 0
      %p79 = por %p77, %p78
      %p80 = scmp.ne.s32.totalorder %s72, %s74
      %p81 = scmp.eq.s32.totalorder %s22, 1
      %p82 = por %p80, %p81
      %p83 = scmp.ne.s32.totalorder %s74, %s75
      %p84 = scmp.eq.s32.totalorder %s22, 0
      %p85 = por %p83, %p84
      %p86 = scmp.ne.s32.totalorder %s74, %s75
      %p87 = scmp.eq.s32.totalorder %s23, 1
      %p88 = por %p86, %p87
      %p90 = scmp.ne.s32.totalorder %s75, %s89
      %p91 = scmp.eq.s32.totalorder %s23, 0
      %p92 = por %p90, %p91
      %s94 = sadd.s32 %s93, 1
      %p97 = scmp.eq.s32.totalorder %s17, 1
      %p98 = scmp.ne.s32.totalorder %s93, %s95
      %p99 = scmp.eq.s32.totalorder %s17, 0
      %p100 = por %p98, %p99
      %p101 = scmp.ne.s32.totalorder %s93, %s95
      %p102 = scmp.eq.s32.totalorder %s22, 1
      %p103 = por %p101, %p102
      %p104 = scmp.ne.s32.totalorder %s95, %s96
      %p105 = scmp.eq.s32.totalorder %s22, 0
      %p106 = por %p104, %p105
      %p107 = scmp.ne.s32.totalorder %s95, %s96
      %p108 = scmp.eq.s32.totalorder %s23, 1
      %p109 = por %p107, %p108
      %p111 = scmp.ne.s32.totalorder %s96, %s110
      %p112 = scmp.eq.s32.totalorder %s23, 0
      %p113 = por %p111, %p112
      %s115 = sadd.s32 %s114, 1
      %p118 = scmp.eq.s32.totalorder %s17, 1
      %p119 = scmp.ne.s32.totalorder %s114, %s116
      %p120 = scmp.eq.s32.totalorder %s17, 0
      %p121 = por %p119, %p120
      %p122 = scmp.ne.s32.totalorder %s114, %s116
      %p123 = scmp.eq.s32.totalorder %s22, 1
      %p124 = por %p122, %p123
      %p125 = scmp.ne.s32.totalorder %s116, %s117
      %p126 = scmp.eq.s32.totalorder %s22, 0
      %p127 = por %p125, %p126
      %p128 = scmp.ne.s32.totalorder %s116, %s117
      %p129 = scmp.eq.s32.totalorder %s23, 1
      %p130 = por %p128, %p129
      %p132 = scmp.ne.s32.totalorder %s117, %s131
      %p133 = scmp.eq.s32.totalorder %s23, 0
      %p134 = por %p132, %p133
      %s136 = sadd.s32 %s135, 1
      %p139 = scmp.eq.s32.totalorder %s17, 1
      %p140 = scmp.ne.s32.totalorder %s135, %s137
      %p141 = scmp.eq.s32.totalorder %s17, 0
      %p142 = por %p140, %p141
      %p143 = scmp.ne.s32.totalorder %s135, %s137
      %p144 = scmp.eq.s32.totalorder %s22, 1
      %p145 = por %p143, %p144
      %p146 = scmp.ne.s32.totalorder %s137, %s138
      %p147 = scmp.eq.s32.totalorder %s22, 0
      %p148 = por %p146, %p147
      %p149 = scmp.ne.s32.totalorder %s137, %s138
      %p150 = scmp.eq.s32.totalorder %s23, 1
      %p151 = por %p149, %p150
      %p153 = scmp.ne.s32.totalorder %s138, %s152
      %p154 = scmp.eq.s32.totalorder %s23, 0
      %p155 = por %p153, %p154
      %s157 = sadd.s32 %s156, 1
      %p160 = scmp.eq.s32.totalorder %s17, 1
      %p161 = scmp.ne.s32.totalorder %s156, %s158
      %p162 = scmp.eq.s32.totalorder %s17, 0
      %p163 = por %p161, %p162
      %p164 = scmp.ne.s32.totalorder %s156, %s158
      %p165 = scmp.eq.s32.totalorder %s22, 1
      %p166 = por %p164, %p165
      %p167 = scmp.ne.s32.totalorder %s158, %s159
      %p168 = scmp.eq.s32.totalorder %s22, 0
      %p169 = por %p167, %p168
      %p170 = scmp.ne.s32.totalorder %s158, %s159
      %p171 = scmp.eq.s32.totalorder %s23, 1
      %p172 = por %p170, %p171
      %p174 = scmp.ne.s32.totalorder %s159, %s173
      %p175 = scmp.eq.s32.totalorder %s23, 0
      %p176 = por %p174, %p175
      %s177 = ssub.s32 %s17, %s24
      %p178 = scmp.eq.s32.totalorder %s177, 0
      %s180 = sadd.s32 %s179, 1
      %s181 = scalar_select %p178, %s179, %s180
      %p184 = pneg %p178
      %p185 = scmp.eq.s32.totalorder %s17, 1
      %p186 = por %p184, %p185
      %p187 = scmp.ne.s32.totalorder %s179, %s182
      %p188 = scmp.eq.s32.totalorder %s17, 0
      %p189 = por %p187, %p188
      %p190 = scmp.ne.s32.totalorder %s179, %s182
      %p191 = scmp.eq.s32.totalorder %s22, 1
      %p192 = por %p190, %p191
      %p193 = scmp.ne.s32.totalorder %s182, %s183
      %p194 = scmp.eq.s32.totalorder %s22, 0
      %p195 = por %p193, %p194
      %p196 = scmp.ne.s32.totalorder %s182, %s183
      %p197 = scmp.eq.s32.totalorder %s23, 1
      %p198 = por %p196, %p197
      %p200 = scmp.ne.s32.totalorder %s183, %s199
      %p201 = scmp.eq.s32.totalorder %s23, 0
      %p202 = por %p200, %p201
      %p203 = scmp.le.s32.totalorder 1, %s17
      %p204 = scmp.lt.s32.totalorder %s17, 3
      %p205 = pnand %p203, %p204
      %p206 = pneg %p205
      // Predicated region
      $region9: #{tpu_custom_call.1} parent=5 // pred_check
        _
      $region10: #{tpu_custom_call.1} parent=5 // pred_check_branch
        %208 = sbr.rel (%p205) target = $region12
      $region11: #{tpu_custom_call.1} parent=5 // pred_region
        %s209 = ssub.s32 %s17, 1
        // Predicated region
        $region13: #{tpu_custom_call.1} parent=11 // pred_check
          %p210 = pneg %p64
        $region14: #{tpu_custom_call.1} parent=11 // pred_check_branch
          %212 = sbr.rel (%p210) target = $region16
        $region15: #{tpu_custom_call.1} parent=11 // pred_region
          %s214 = ssub.s32 4096, 4096
          %215 = vsyncadd [#allocation5], %s214
          %s216 = sshll.u32 [#allocation4], 4
          %s217 = int_to_ptr.vmem [resolvable:$true] %s216
          %222 = dma.hbm_to_vmem [thread:$0]  %s1, 4096, %s217, [#allocation5], 128, 128, 8
        $region16: #{tpu_custom_call.1} parent=11 // pred_fallthru
          _
        // Predicated region
        $region17: #{tpu_custom_call.1} parent=11 // pred_check
          %p223 = pneg %p85
        $region18: #{tpu_custom_call.1} parent=11 // pred_check_branch
          %225 = sbr.rel (%p223) target = $region20
        $region19: #{tpu_custom_call.1} parent=11 // pred_region
          _
        $region20: #{tpu_custom_call.1} parent=11 // pred_fallthru
          _
        // Predicated region
        $region21: #{tpu_custom_call.1} parent=11 // pred_check
          %p226 = pneg %p106
        $region22: #{tpu_custom_call.1} parent=11 // pred_check_branch
          %228 = sbr.rel (%p226) target = $region24
        $region23: #{tpu_custom_call.1} parent=11 // pred_region
          %s230 = ssub.s32 4096, 4096
          %231 = vsyncadd [#allocation5], %s230
          %s232 = sshll.u32 [#allocation6], 4
          %s233 = int_to_ptr.vmem [resolvable:$true] %s232
          %238 = dma.hbm_to_vmem [thread:$0]  %s3, 4096, %s233, [#allocation5], 128, 128, 8
        $region24: #{tpu_custom_call.1} parent=11 // pred_fallthru
          _
        // Predicated region
        $region25: #{tpu_custom_call.1} parent=11 // pred_check
          %p239 = pneg %p127
        $region26: #{tpu_custom_call.1} parent=11 // pred_check_branch
          %241 = sbr.rel (%p239) target = $region28
        $region27: #{tpu_custom_call.1} parent=11 // pred_region
          _
        $region28: #{tpu_custom_call.1} parent=11 // pred_fallthru
          _
        // Predicated region
        $region29: #{tpu_custom_call.1} parent=11 // pred_check
          %p242 = pneg %p148
        $region30: #{tpu_custom_call.1} parent=11 // pred_check_branch
          %244 = sbr.rel (%p242) target = $region32
        $region31: #{tpu_custom_call.1} parent=11 // pred_region
          _
        $region32: #{tpu_custom_call.1} parent=11 // pred_fallthru
          _
        // Predicated region
        $region33: #{tpu_custom_call.1} parent=11 // pred_check
          %p245 = pneg %p169
        $region34: #{tpu_custom_call.1} parent=11 // pred_check_branch
          %247 = sbr.rel (%p245) target = $region36
        $region35: #{tpu_custom_call.1} parent=11 // pred_region
          _
        $region36: #{tpu_custom_call.1} parent=11 // pred_fallthru
          _
      $region12: #{tpu_custom_call.1} parent=5 // pred_fallthru
        _
      %p248 = scmp.lt.s32.totalorder %s17, 2
      // Predicated region
      $region37: #{tpu_custom_call.1} parent=5 // pred_check
        %p249 = pneg %p248
      $region38: #{tpu_custom_call.1} parent=5 // pred_check_branch
        %251 = sbr.rel (%p249) target = $region40
      $region39: #{tpu_custom_call.1} parent=5 // pred_region
        // Predicated region
        $region41: #{tpu_custom_call.1} parent=39 // pred_check
          %p252 = pneg %p37
        $region42: #{tpu_custom_call.1} parent=39 // pred_check_branch
          %254 = sbr.rel (%p252) target = $region44
        $region43: #{tpu_custom_call.1} parent=39 // pred_region
          %s255 = sand.u32 %s27, 1
          %s256 = scalar_lea.sflag [#allocation3], %s255
          %s257 = sand.u32 %s27, 1
          %s258 = smul.addr %s257, 1024
          %s259 = scalar_lea.vmem [#allocation2], %s258
          %s260 = smul.u32 64, %s17
          %s262 = ssub.s32 16384, 16384
          %263 = vsyncadd %s256, %s262
          %s264 = smul.addr %s260, 2
          %s265 = smul.addr %s264, 128
          %s266 = scalar_lea.hbm %s0, %s265
          %s267 = sshll.u32 %s259, 4
          %s268 = int_to_ptr.vmem [resolvable:$true] %s267
          %273 = dma.hbm_to_vmem [thread:$0]  %s266, 16384, %s268, %s256, 256, 256, 16
        $region44: #{tpu_custom_call.1} parent=39 // pred_fallthru
          _
      $region40: #{tpu_custom_call.1} parent=5 // pred_fallthru
        _
      %p274 = scmp.le.s32.totalorder 1, %s17
      %p275 = scmp.lt.s32.totalorder %s17, 3
      %p276 = pnand %p274, %p275
      %p277 = pneg %p276
      // Predicated region
      $region45: #{tpu_custom_call.1} parent=5 // pred_check
        _
      $region46: #{tpu_custom_call.1} parent=5 // pred_check_branch
        %279 = sbr.rel (%p276) target = $region48
      $region47: #{tpu_custom_call.1} parent=5 // pred_region
        %s280 = ssub.s32 %s17, 1
        %s281 = sand.u32 %s30, 1
        %s282 = scalar_lea.sflag [#allocation3], %s281
        %s283 = sand.u32 %s30, 1
        %s284 = smul.addr %s283, 1024
        %s285 = scalar_lea.vmem [#allocation2], %s284
        // Predicated region
        $region49: #{tpu_custom_call.1} parent=47 // pred_check
          %p286 = pneg %p43
        $region50: #{tpu_custom_call.1} parent=47 // pred_check_branch
          %288 = sbr.rel (%p286) target = $region52
        $region51: #{tpu_custom_call.1} parent=47 // pred_region
          %289 = dma.done %s282, 16384
        $region52: #{tpu_custom_call.1} parent=47 // pred_fallthru
          _
        // Predicated region
        $region53: #{tpu_custom_call.1} parent=47 // pred_check
          %p290 = pneg %p64
        $region54: #{tpu_custom_call.1} parent=47 // pred_check_branch
          %292 = sbr.rel (%p290) target = $region56
        $region55: #{tpu_custom_call.1} parent=47 // pred_region
          %293 = dma.done [#allocation5], 4096
        $region56: #{tpu_custom_call.1} parent=47 // pred_fallthru
          _
        // Predicated region
        $region57: #{tpu_custom_call.1} parent=47 // pred_check
          %p294 = pneg %p106
        $region58: #{tpu_custom_call.1} parent=47 // pred_check_branch
          %296 = sbr.rel (%p294) target = $region60
        $region59: #{tpu_custom_call.1} parent=47 // pred_region
          %297 = dma.done [#allocation5], 4096
        $region60: #{tpu_custom_call.1} parent=47 // pred_fallthru
          _
        %s298 = sand.u32 %s30, 1
        %s299 = scalar_lea.sflag [#allocation3], %s298
        %s300 = sand.u32 %s30, 1
        %s301 = smul.addr %s300, 1024
        %s302 = scalar_lea.vmem [#allocation2], %s301
        %p303 = pneg %p43
        %p304 = pneg %p40
        %p305 = pneg %p64
        %p306 = pneg %p61
        %p307 = pneg %p85
        %p308 = pneg %p82
        %p309 = pneg %p106
        %p310 = pneg %p103
        %p311 = pneg %p127
        %p312 = pneg %p124
        %p313 = pneg %p148
        %p314 = pneg %p145
        %p315 = pneg %p169
        %p316 = pneg %p166
        %p317 = pneg %p195
        %p318 = pneg %p192
        %s319 = smul.u32 64, %s22
        %p320 = scmp.lt.s32.totalorder %s319, 127
        %s321 = scalar_select %p320, %s319, 127
        %s322 = smul.addr %s321, 8
        %s323 = scalar_lea.vmem %s7, %s322
        %s324 = smul.u32 64, %s22
        %s325 = smul.u32 64, %s22
        %p326 = scmp.lt.s32.totalorder %s325, 127
        %s327 = scalar_select %p326, %s325, 127
        %s328 = smul.addr %s327, 8
        %s329 = scalar_lea.vmem %s7, %s328
        %s330 = smul.u32 64, %s22
        %v332 = vld [vmem:[%s285] sm:$0xff]
        %v333 = vld [vmem:[%s285 + $0x8] sm:$0xff]
        %v334 = vld [vmem:[%s285 + $0x10] sm:$0xff]
        %v335 = vld [vmem:[%s285 + $0x18] sm:$0xff]
        %v336 = vld [vmem:[%s285 + $0x20] sm:$0xff]
        %v337 = vld [vmem:[%s285 + $0x28] sm:$0xff]
        %v338 = vld [vmem:[%s285 + $0x30] sm:$0xff]
        %v339 = vld [vmem:[%s285 + $0x38] sm:$0xff]
        %v340 = vld [vmem:[%s285 + $0x40] sm:$0xff]
        %v341 = vld [vmem:[%s285 + $0x48] sm:$0xff]
        %v342 = vld [vmem:[%s285 + $0x50] sm:$0xff]
        %v343 = vld [vmem:[%s285 + $0x58] sm:$0xff]
        %v344 = vld [vmem:[%s285 + $0x60] sm:$0xff]
        %v345 = vld [vmem:[%s285 + $0x68] sm:$0xff]
        %v346 = vld [vmem:[%s285 + $0x70] sm:$0xff]
        %v347 = vld [vmem:[%s285 + $0x78] sm:$0xff]
        %v348 = vld [vmem:[%s285 + $0x80] sm:$0xff]
        %v349 = vld [vmem:[%s285 + $0x88] sm:$0xff]
        %v350 = vld [vmem:[%s285 + $0x90] sm:$0xff]
        %v351 = vld [vmem:[%s285 + $0x98] sm:$0xff]
        %v352 = vld [vmem:[%s285 + $0xa0] sm:$0xff]
        %v353 = vld [vmem:[%s285 + $0xa8] sm:$0xff]
        %v354 = vld [vmem:[%s285 + $0xb0] sm:$0xff]
        %v355 = vld [vmem:[%s285 + $0xb8] sm:$0xff]
        %v356 = vld [vmem:[%s285 + $0xc0] sm:$0xff]
        %v357 = vld [vmem:[%s285 + $0xc8] sm:$0xff]
        %v358 = vld [vmem:[%s285 + $0xd0] sm:$0xff]
        %v359 = vld [vmem:[%s285 + $0xd8] sm:$0xff]
        %v360 = vld [vmem:[%s285 + $0xe0] sm:$0xff]
        %v361 = vld [vmem:[%s285 + $0xe8] sm:$0xff]
        %v362 = vld [vmem:[%s285 + $0xf0] sm:$0xff]
        %v363 = vld [vmem:[%s285 + $0xf8] sm:$0xff]
        %v364 = vld [vmem:[%s285 + $0x100] sm:$0xff]
        %v365 = vld [vmem:[%s285 + $0x108] sm:$0xff]
        %v366 = vld [vmem:[%s285 + $0x110] sm:$0xff]
        %v367 = vld [vmem:[%s285 + $0x118] sm:$0xff]
        %v368 = vld [vmem:[%s285 + $0x120] sm:$0xff]
        %v369 = vld [vmem:[%s285 + $0x128] sm:$0xff]
        %v370 = vld [vmem:[%s285 + $0x130] sm:$0xff]
        %v371 = vld [vmem:[%s285 + $0x138] sm:$0xff]
        %v372 = vld [vmem:[%s285 + $0x140] sm:$0xff]
        %v373 = vld [vmem:[%s285 + $0x148] sm:$0xff]
        %v374 = vld [vmem:[%s285 + $0x150] sm:$0xff]
        %v375 = vld [vmem:[%s285 + $0x158] sm:$0xff]
        %v376 = vld [vmem:[%s285 + $0x160] sm:$0xff]
        %v377 = vld [vmem:[%s285 + $0x168] sm:$0xff]
        %v378 = vld [vmem:[%s285 + $0x170] sm:$0xff]
        %v379 = vld [vmem:[%s285 + $0x178] sm:$0xff]
        %v380 = vld [vmem:[%s285 + $0x180] sm:$0xff]
        %v381 = vld [vmem:[%s285 + $0x188] sm:$0xff]
        %v382 = vld [vmem:[%s285 + $0x190] sm:$0xff]
        %v383 = vld [vmem:[%s285 + $0x198] sm:$0xff]
        %v384 = vld [vmem:[%s285 + $0x1a0] sm:$0xff]
        %v385 = vld [vmem:[%s285 + $0x1a8] sm:$0xff]
        %v386 = vld [vmem:[%s285 + $0x1b0] sm:$0xff]
        %v387 = vld [vmem:[%s285 + $0x1b8] sm:$0xff]
        %v388 = vld [vmem:[%s285 + $0x1c0] sm:$0xff]
        %v389 = vld [vmem:[%s285 + $0x1c8] sm:$0xff]
        %v390 = vld [vmem:[%s285 + $0x1d0] sm:$0xff]
        %v391 = vld [vmem:[%s285 + $0x1d8] sm:$0xff]
        %v392 = vld [vmem:[%s285 + $0x1e0] sm:$0xff]
        %v393 = vld [vmem:[%s285 + $0x1e8] sm:$0xff]
        %v394 = vld [vmem:[%s285 + $0x1f0] sm:$0xff]
        %v395 = vld [vmem:[%s285 + $0x1f8] sm:$0xff]
        %v396 = vld [vmem:[%s285 + $0x200] sm:$0xff]
        %v397 = vld [vmem:[%s285 + $0x208] sm:$0xff]
        %v398 = vld [vmem:[%s285 + $0x210] sm:$0xff]
        %v399 = vld [vmem:[%s285 + $0x218] sm:$0xff]
        %v400 = vld [vmem:[%s285 + $0x220] sm:$0xff]
        %v401 = vld [vmem:[%s285 + $0x228] sm:$0xff]
        %v402 = vld [vmem:[%s285 + $0x230] sm:$0xff]
        %v403 = vld [vmem:[%s285 + $0x238] sm:$0xff]
        %v404 = vld [vmem:[%s285 + $0x240] sm:$0xff]
        %v405 = vld [vmem:[%s285 + $0x248] sm:$0xff]
        %v406 = vld [vmem:[%s285 + $0x250] sm:$0xff]
        %v407 = vld [vmem:[%s285 + $0x258] sm:$0xff]
        %v408 = vld [vmem:[%s285 + $0x260] sm:$0xff]
        %v409 = vld [vmem:[%s285 + $0x268] sm:$0xff]
        %v410 = vld [vmem:[%s285 + $0x270] sm:$0xff]
        %v411 = vld [vmem:[%s285 + $0x278] sm:$0xff]
        %v412 = vld [vmem:[%s285 + $0x280] sm:$0xff]
        %v413 = vld [vmem:[%s285 + $0x288] sm:$0xff]
        %v414 = vld [vmem:[%s285 + $0x290] sm:$0xff]
        %v415 = vld [vmem:[%s285 + $0x298] sm:$0xff]
        %v416 = vld [vmem:[%s285 + $0x2a0] sm:$0xff]
        %v417 = vld [vmem:[%s285 + $0x2a8] sm:$0xff]
        %v418 = vld [vmem:[%s285 + $0x2b0] sm:$0xff]
        %v419 = vld [vmem:[%s285 + $0x2b8] sm:$0xff]
        %v420 = vld [vmem:[%s285 + $0x2c0] sm:$0xff]
        %v421 = vld [vmem:[%s285 + $0x2c8] sm:$0xff]
        %v422 = vld [vmem:[%s285 + $0x2d0] sm:$0xff]
        %v423 = vld [vmem:[%s285 + $0x2d8] sm:$0xff]
        %v424 = vld [vmem:[%s285 + $0x2e0] sm:$0xff]
        %v425 = vld [vmem:[%s285 + $0x2e8] sm:$0xff]
        %v426 = vld [vmem:[%s285 + $0x2f0] sm:$0xff]
        %v427 = vld [vmem:[%s285 + $0x2f8] sm:$0xff]
        %v428 = vld [vmem:[%s285 + $0x300] sm:$0xff]
        %v429 = vld [vmem:[%s285 + $0x308] sm:$0xff]
        %v430 = vld [vmem:[%s285 + $0x310] sm:$0xff]
        %v431 = vld [vmem:[%s285 + $0x318] sm:$0xff]
        %v432 = vld [vmem:[%s285 + $0x320] sm:$0xff]
        %v433 = vld [vmem:[%s285 + $0x328] sm:$0xff]
        %v434 = vld [vmem:[%s285 + $0x330] sm:$0xff]
        %v435 = vld [vmem:[%s285 + $0x338] sm:$0xff]
        %v436 = vld [vmem:[%s285 + $0x340] sm:$0xff]
        %v437 = vld [vmem:[%s285 + $0x348] sm:$0xff]
        %v438 = vld [vmem:[%s285 + $0x350] sm:$0xff]
        %v439 = vld [vmem:[%s285 + $0x358] sm:$0xff]
        %v440 = vld [vmem:[%s285 + $0x360] sm:$0xff]
        %v441 = vld [vmem:[%s285 + $0x368] sm:$0xff]
        %v442 = vld [vmem:[%s285 + $0x370] sm:$0xff]
        %v443 = vld [vmem:[%s285 + $0x378] sm:$0xff]
        %v444 = vld [vmem:[%s285 + $0x380] sm:$0xff]
        %v445 = vld [vmem:[%s285 + $0x388] sm:$0xff]
        %v446 = vld [vmem:[%s285 + $0x390] sm:$0xff]
        %v447 = vld [vmem:[%s285 + $0x398] sm:$0xff]
        %v448 = vld [vmem:[%s285 + $0x3a0] sm:$0xff]
        %v449 = vld [vmem:[%s285 + $0x3a8] sm:$0xff]
        %v450 = vld [vmem:[%s285 + $0x3b0] sm:$0xff]
        %v451 = vld [vmem:[%s285 + $0x3b8] sm:$0xff]
        %v452 = vld [vmem:[%s285 + $0x3c0] sm:$0xff]
        %v453 = vld [vmem:[%s285 + $0x3c8] sm:$0xff]
        %v454 = vld [vmem:[%s285 + $0x3d0] sm:$0xff]
        %v455 = vld [vmem:[%s285 + $0x3d8] sm:$0xff]
        %v456 = vld [vmem:[%s285 + $0x3e0] sm:$0xff]
        %v457 = vld [vmem:[%s285 + $0x3e8] sm:$0xff]
        %v458 = vld [vmem:[%s285 + $0x3f0] sm:$0xff]
        %v459 = vld [vmem:[%s285 + $0x3f8] sm:$0xff]
        %v460 = vpack.c.bf16 %v334, %v332
        %v461 = vpack.c.bf16 %v335, %v333
        %v462 = vpack.c.bf16 %v338, %v336
        %v463 = vpack.c.bf16 %v339, %v337
        %v464 = vpack.c.bf16 %v342, %v340
        %v465 = vpack.c.bf16 %v343, %v341
        %v466 = vpack.c.bf16 %v346, %v344
        %v467 = vpack.c.bf16 %v347, %v345
        %v468 = vpack.c.bf16 %v350, %v348
        %v469 = vpack.c.bf16 %v351, %v349
        %v470 = vpack.c.bf16 %v354, %v352
        %v471 = vpack.c.bf16 %v355, %v353
        %v472 = vpack.c.bf16 %v358, %v356
        %v473 = vpack.c.bf16 %v359, %v357
        %v474 = vpack.c.bf16 %v362, %v360
        %v475 = vpack.c.bf16 %v363, %v361
        %v476 = vpack.c.bf16 %v366, %v364
        %v477 = vpack.c.bf16 %v367, %v365
        %v478 = vpack.c.bf16 %v370, %v368
        %v479 = vpack.c.bf16 %v371, %v369
        %v480 = vpack.c.bf16 %v374, %v372
        %v481 = vpack.c.bf16 %v375, %v373
        %v482 = vpack.c.bf16 %v378, %v376
        %v483 = vpack.c.bf16 %v379, %v377
        %v484 = vpack.c.bf16 %v382, %v380
        %v485 = vpack.c.bf16 %v383, %v381
        %v486 = vpack.c.bf16 %v386, %v384
        %v487 = vpack.c.bf16 %v387, %v385
        %v488 = vpack.c.bf16 %v390, %v388
        %v489 = vpack.c.bf16 %v391, %v389
        %v490 = vpack.c.bf16 %v394, %v392
        %v491 = vpack.c.bf16 %v395, %v393
        %v492 = vpack.c.bf16 %v398, %v396
        %v493 = vpack.c.bf16 %v399, %v397
        %v494 = vpack.c.bf16 %v402, %v400
        %v495 = vpack.c.bf16 %v403, %v401
        %v496 = vpack.c.bf16 %v406, %v404
        %v497 = vpack.c.bf16 %v407, %v405
        %v498 = vpack.c.bf16 %v410, %v408
        %v499 = vpack.c.bf16 %v411, %v409
        %v500 = vpack.c.bf16 %v414, %v412
        %v501 = vpack.c.bf16 %v415, %v413
        %v502 = vpack.c.bf16 %v418, %v416
        %v503 = vpack.c.bf16 %v419, %v417
        %v504 = vpack.c.bf16 %v422, %v420
        %v505 = vpack.c.bf16 %v423, %v421
        %v506 = vpack.c.bf16 %v426, %v424
        %v507 = vpack.c.bf16 %v427, %v425
        %v508 = vpack.c.bf16 %v430, %v428
        %v509 = vpack.c.bf16 %v431, %v429
        %v510 = vpack.c.bf16 %v434, %v432
        %v511 = vpack.c.bf16 %v435, %v433
        %v512 = vpack.c.bf16 %v438, %v436
        %v513 = vpack.c.bf16 %v439, %v437
        %v514 = vpack.c.bf16 %v442, %v440
        %v515 = vpack.c.bf16 %v443, %v441
        %v516 = vpack.c.bf16 %v446, %v444
        %v517 = vpack.c.bf16 %v447, %v445
        %v518 = vpack.c.bf16 %v450, %v448
        %v519 = vpack.c.bf16 %v451, %v449
        %v520 = vpack.c.bf16 %v454, %v452
        %v521 = vpack.c.bf16 %v455, %v453
        %v522 = vpack.c.bf16 %v458, %v456
        %v523 = vpack.c.bf16 %v459, %v457
        %v524 = vld [vmem:[#allocation4] sm:$0xff]
        %v525 = vld [vmem:[#allocation4 + $0x8] sm:$0xff]
        %v526 = vld [vmem:[#allocation4 + $0x10] sm:$0xff]
        %v527 = vld [vmem:[#allocation4 + $0x18] sm:$0xff]
        %v528 = vld [vmem:[#allocation4 + $0x20] sm:$0xff]
        %v529 = vld [vmem:[#allocation4 + $0x28] sm:$0xff]
        %v530 = vld [vmem:[#allocation4 + $0x30] sm:$0xff]
        %v531 = vld [vmem:[#allocation4 + $0x38] sm:$0xff]
        %v532 = vld [vmem:[#allocation4 + $0x40] sm:$0xff]
        %v533 = vld [vmem:[#allocation4 + $0x48] sm:$0xff]
        %v534 = vld [vmem:[#allocation4 + $0x50] sm:$0xff]
        %v535 = vld [vmem:[#allocation4 + $0x58] sm:$0xff]
        %v536 = vld [vmem:[#allocation4 + $0x60] sm:$0xff]
        %v537 = vld [vmem:[#allocation4 + $0x68] sm:$0xff]
        %v538 = vld [vmem:[#allocation4 + $0x70] sm:$0xff]
        %v539 = vld [vmem:[#allocation4 + $0x78] sm:$0xff]
        %v540 = vld [vmem:[#allocation4 + $0x80] sm:$0xff]
        %v541 = vld [vmem:[#allocation4 + $0x88] sm:$0xff]
        %v542 = vld [vmem:[#allocation4 + $0x90] sm:$0xff]
        %v543 = vld [vmem:[#allocation4 + $0x98] sm:$0xff]
        %v544 = vld [vmem:[#allocation4 + $0xa0] sm:$0xff]
        %v545 = vld [vmem:[#allocation4 + $0xa8] sm:$0xff]
        %v546 = vld [vmem:[#allocation4 + $0xb0] sm:$0xff]
        %v547 = vld [vmem:[#allocation4 + $0xb8] sm:$0xff]
        %v548 = vld [vmem:[#allocation4 + $0xc0] sm:$0xff]
        %v549 = vld [vmem:[#allocation4 + $0xc8] sm:$0xff]
        %v550 = vld [vmem:[#allocation4 + $0xd0] sm:$0xff]
        %v551 = vld [vmem:[#allocation4 + $0xd8] sm:$0xff]
        %v552 = vld [vmem:[#allocation4 + $0xe0] sm:$0xff]
        %v553 = vld [vmem:[#allocation4 + $0xe8] sm:$0xff]
        %v554 = vld [vmem:[#allocation4 + $0xf0] sm:$0xff]
        %v555 = vld [vmem:[#allocation4 + $0xf8] sm:$0xff]
        %v556 = vld [vmem:[%s2] sm:$0x3]
        %v558 = vlaneseq
        %v559 = vshrl.u32 %v558, 7
        %v560 = vsub.s32 0, %v559
        %v561 = vrot.slane %v556, %v560
        %v562 = vlaneseq
        %v563 = vshrl.u32 %v562, 7
        %v564 = vsub.s32 1, %v563
        %v565 = vrot.slane %v556, %v564
        %v600 = vunpack.c.l.b16 %v524
        %v601 = vunpack.c.h.b16 %v524
        %v602 = vunpack.c.l.b16 %v525
        %v603 = vunpack.c.h.b16 %v525
        %v604 = vunpack.c.l.b16 %v526
        %v605 = vunpack.c.h.b16 %v526
        %v606 = vunpack.c.l.b16 %v527
        %v607 = vunpack.c.h.b16 %v527
        %v608 = vunpack.c.l.b16 %v528
        %v609 = vunpack.c.h.b16 %v528
        %v610 = vunpack.c.l.b16 %v529
        %v611 = vunpack.c.h.b16 %v529
        %v612 = vunpack.c.l.b16 %v530
        %v613 = vunpack.c.h.b16 %v530
        %v614 = vunpack.c.l.b16 %v531
        %v615 = vunpack.c.h.b16 %v531
        %v616 = vunpack.c.l.b16 %v532
        %v617 = vunpack.c.h.b16 %v532
        %v618 = vunpack.c.l.b16 %v533
        %v619 = vunpack.c.h.b16 %v533
        %v620 = vunpack.c.l.b16 %v534
        %v621 = vunpack.c.h.b16 %v534
        %v622 = vunpack.c.l.b16 %v535
        %v623 = vunpack.c.h.b16 %v535
        %v624 = vunpack.c.l.b16 %v536
        %v625 = vunpack.c.h.b16 %v536
        %v626 = vunpack.c.l.b16 %v537
        %v627 = vunpack.c.h.b16 %v537
        %v628 = vunpack.c.l.b16 %v538
        %v629 = vunpack.c.h.b16 %v538
        %v630 = vunpack.c.l.b16 %v539
        %v631 = vunpack.c.h.b16 %v539
        %v632 = vunpack.c.l.b16 %v540
        %v633 = vunpack.c.h.b16 %v540
        %v634 = vunpack.c.l.b16 %v541
        %v635 = vunpack.c.h.b16 %v541
        %v636 = vunpack.c.l.b16 %v542
        %v637 = vunpack.c.h.b16 %v542
        %v638 = vunpack.c.l.b16 %v543
        %v639 = vunpack.c.h.b16 %v543
        %v640 = vunpack.c.l.b16 %v544
        %v641 = vunpack.c.h.b16 %v544
        %v642 = vunpack.c.l.b16 %v545
        %v643 = vunpack.c.h.b16 %v545
        %v644 = vunpack.c.l.b16 %v546
        %v645 = vunpack.c.h.b16 %v546
        %v646 = vunpack.c.l.b16 %v547
        %v647 = vunpack.c.h.b16 %v547
        %v648 = vunpack.c.l.b16 %v548
        %v649 = vunpack.c.h.b16 %v548
        %v650 = vunpack.c.l.b16 %v549
        %v651 = vunpack.c.h.b16 %v549
        %v652 = vunpack.c.l.b16 %v550
        %v653 = vunpack.c.h.b16 %v550
        %v654 = vunpack.c.l.b16 %v551
        %v655 = vunpack.c.h.b16 %v551
        %v656 = vunpack.c.l.b16 %v552
        %v657 = vunpack.c.h.b16 %v552
        %v658 = vunpack.c.l.b16 %v553
        %v659 = vunpack.c.h.b16 %v553
        %v660 = vunpack.c.l.b16 %v554
        %v661 = vunpack.c.h.b16 %v554
        %v662 = vunpack.c.l.b16 %v555
        %v663 = vunpack.c.h.b16 %v555
        %v664 = vpack.c.b16 %v602, %v600
        %v665 = vpack.c.b16 %v603, %v601
        %v666 = vpack.c.b16 %v606, %v604
        %v667 = vpack.c.b16 %v607, %v605
        %v668 = vpack.c.b16 %v610, %v608
        %v669 = vpack.c.b16 %v611, %v609
        %v670 = vpack.c.b16 %v614, %v612
        %v671 = vpack.c.b16 %v615, %v613
        %v672 = vpack.c.b16 %v618, %v616
        %v673 = vpack.c.b16 %v619, %v617
        %v674 = vpack.c.b16 %v622, %v620
        %v675 = vpack.c.b16 %v623, %v621
        %v676 = vpack.c.b16 %v626, %v624
        %v677 = vpack.c.b16 %v627, %v625
        %v678 = vpack.c.b16 %v630, %v628
        %v679 = vpack.c.b16 %v631, %v629
        %v680 = vpack.c.b16 %v634, %v632
        %v681 = vpack.c.b16 %v635, %v633
        %v682 = vpack.c.b16 %v638, %v636
        %v683 = vpack.c.b16 %v639, %v637
        %v684 = vpack.c.b16 %v642, %v640
        %v685 = vpack.c.b16 %v643, %v641
        %v686 = vpack.c.b16 %v646, %v644
        %v687 = vpack.c.b16 %v647, %v645
        %v688 = vpack.c.b16 %v650, %v648
        %v689 = vpack.c.b16 %v651, %v649
        %v690 = vpack.c.b16 %v654, %v652
        %v691 = vpack.c.b16 %v655, %v653
        %v692 = vpack.c.b16 %v658, %v656
        %v693 = vpack.c.b16 %v659, %v657
        %v694 = vpack.c.b16 %v662, %v660
        %v695 = vpack.c.b16 %v663, %v661
        %728 = vmatprep.subr.bf16.mxu0 %v665
        %729 = vmatpush1.bf16.msra.mxu0 %v664
        %730 = vmatprep.subr.bf16.mxu0 %v667
        %731 = vmatpush1.bf16.msra.mxu0 %v666
        %732 = vmatprep.subr.bf16.mxu0 %v669
        %733 = vmatpush1.bf16.msra.mxu0 %v668
        %734 = vmatprep.subr.bf16.mxu0 %v671
        %735 = vmatpush1.bf16.msra.mxu0 %v670
        %736 = vmatprep.subr.bf16.mxu0 %v673
        %737 = vmatpush1.bf16.msra.mxu0 %v672
        %738 = vmatprep.subr.bf16.mxu0 %v675
        %739 = vmatpush1.bf16.msra.mxu0 %v674
        %740 = vmatprep.subr.bf16.mxu0 %v677
        %741 = vmatpush1.bf16.msra.mxu0 %v676
        %742 = vmatprep.subr.bf16.mxu0 %v679
        %743 = vmatpush1.bf16.msra.mxu0 %v678
        %744 = vmatprep.subr.bf16.mxu0 %v681
        %745 = vmatpush1.bf16.msra.mxu0 %v680
        %746 = vmatprep.subr.bf16.mxu0 %v683
        %747 = vmatpush1.bf16.msra.mxu0 %v682
        %748 = vmatprep.subr.bf16.mxu0 %v685
        %749 = vmatpush1.bf16.msra.mxu0 %v684
        %750 = vmatprep.subr.bf16.mxu0 %v687
        %751 = vmatpush1.bf16.msra.mxu0 %v686
        %752 = vmatprep.subr.bf16.mxu0 %v689
        %753 = vmatpush1.bf16.msra.mxu0 %v688
        %754 = vmatprep.subr.bf16.mxu0 %v691
        %755 = vmatpush1.bf16.msra.mxu0 %v690
        %756 = vmatprep.subr.bf16.mxu0 %v693
        %757 = vmatpush1.bf16.msra.mxu0 %v692
        %758 = vmatprep.subr.bf16.mxu0 %v695
        %759 = vmatpush1.bf16.msra.mxu0 %v694
        %760 = vmatprep.mubr.bf16.mxu0 %v461
        %761 = vmatmul.mubr.bf16.gmra.mrb[0].mxu0 %v460
        %v762 = vpop.f32.mrb[0].mxu0
        %v763 = vadd.f32 %v561, %v762
        %v764 = vpop.f32.mrb[0].mxu0
        %v765 = vadd.f32 %v565, %v764
        %v766 = vpop.f32.mrb[0].mxu0
        %v767 = vadd.f32 %v561, %v766
        %v768 = vpop.f32.mrb[0].mxu0
        %v769 = vadd.f32 %v565, %v768
        %770 = vmatprep.mubr.bf16.mxu0 %v463
        %771 = vmatmul.mubr.bf16.gmra.mrb[0].mxu0 %v462
        %v772 = vpop.f32.mrb[0].mxu0
        %v773 = vadd.f32 %v561, %v772
        %v774 = vpop.f32.mrb[0].mxu0
        %v775 = vadd.f32 %v565, %v774
        %v776 = vpop.f32.mrb[0].mxu0
        %v777 = vadd.f32 %v561, %v776
        %v778 = vpop.f32.mrb[0].mxu0
        %v779 = vadd.f32 %v565, %v778
        %780 = vmatprep.mubr.bf16.mxu0 %v465
        %781 = vmatmul.mubr.bf16.gmra.mrb[0].mxu0 %v464
        %v782 = vpop.f32.mrb[0].mxu0
        %v783 = vadd.f32 %v561, %v782
        %v784 = vpop.f32.mrb[0].mxu0
        %v785 = vadd.f32 %v565, %v784
        %v786 = vpop.f32.mrb[0].mxu0
        %v787 = vadd.f32 %v561, %v786
        %v788 = vpop.f32.mrb[0].mxu0
        %v789 = vadd.f32 %v565, %v788
        %790 = vmatprep.mubr.bf16.mxu0 %v467
        %791 = vmatmul.mubr.bf16.gmra.mrb[0].mxu0 %v466
        %v792 = vpop.f32.mrb[0].mxu0
        %v793 = vadd.f32 %v561, %v792
        %v794 = vpop.f32.mrb[0].mxu0
        %v795 = vadd.f32 %v565, %v794
        %v796 = vpop.f32.mrb[0].mxu0
        %v797 = vadd.f32 %v561, %v796
        %v798 = vpop.f32.mrb[0].mxu0
        %v799 = vadd.f32 %v565, %v798
        %800 = vmatprep.mubr.bf16.mxu0 %v469
        %801 = vmatmul.mubr.bf16.gmra.mrb[0].mxu0 %v468
        %v802 = vpop.f32.mrb[0].mxu0
        %v803 = vadd.f32 %v561, %v802
        %v804 = vpop.f32.mrb[0].mxu0
        %v805 = vadd.f32 %v565, %v804
        %v806 = vpop.f32.mrb[0].mxu0
        %v807 = vadd.f32 %v561, %v806
        %v808 = vpop.f32.mrb[0].mxu0
        %v809 = vadd.f32 %v565, %v808
        %810 = vmatprep.mubr.bf16.mxu0 %v471
        %811 = vmatmul.mubr.bf16.gmra.mrb[0].mxu0 %v470
        %v812 = vpop.f32.mrb[0].mxu0
        %v813 = vadd.f32 %v561, %v812
        %v814 = vpop.f32.mrb[0].mxu0
        %v815 = vadd.f32 %v565, %v814
        %v816 = vpop.f32.mrb[0].mxu0
        %v817 = vadd.f32 %v561, %v816
        %v818 = vpop.f32.mrb[0].mxu0
        %v819 = vadd.f32 %v565, %v818
        %820 = vmatprep.mubr.bf16.mxu0 %v473
        %821 = vmatmul.mubr.bf16.gmra.mrb[0].mxu0 %v472
        %v822 = vpop.f32.mrb[0].mxu0
        %v823 = vadd.f32 %v561, %v822
        %v824 = vpop.f32.mrb[0].mxu0
        %v825 = vadd.f32 %v565, %v824
        %v826 = vpop.f32.mrb[0].mxu0
        %v827 = vadd.f32 %v561, %v826
        %v828 = vpop.f32.mrb[0].mxu0
        %v829 = vadd.f32 %v565, %v828
        %830 = vmatprep.mubr.bf16.mxu0 %v475
        %831 = vmatmul.mubr.bf16.gmra.mrb[0].mxu0 %v474
        %v832 = vpop.f32.mrb[0].mxu0
        %v833 = vadd.f32 %v561, %v832
        %v834 = vpop.f32.mrb[0].mxu0
        %v835 = vadd.f32 %v565, %v834
        %v836 = vpop.f32.mrb[0].mxu0
        %v837 = vadd.f32 %v561, %v836
        %v838 = vpop.f32.mrb[0].mxu0
        %v839 = vadd.f32 %v565, %v838
        %840 = vmatprep.mubr.bf16.mxu0 %v477
        %841 = vmatmul.mubr.bf16.gmra.mrb[0].mxu0 %v476
        %v842 = vpop.f32.mrb[0].mxu0
        %v843 = vadd.f32 %v561, %v842
        %v844 = vpop.f32.mrb[0].mxu0
        %v845 = vadd.f32 %v565, %v844
        %v846 = vpop.f32.mrb[0].mxu0
        %v847 = vadd.f32 %v561, %v846
        %v848 = vpop.f32.mrb[0].mxu0
        %v849 = vadd.f32 %v565, %v848
        %850 = vmatprep.mubr.bf16.mxu0 %v479
        %851 = vmatmul.mubr.bf16.gmra.mrb[0].mxu0 %v478
        %v852 = vpop.f32.mrb[0].mxu0
        %v853 = vadd.f32 %v561, %v852
        %v854 = vpop.f32.mrb[0].mxu0
        %v855 = vadd.f32 %v565, %v854
        %v856 = vpop.f32.mrb[0].mxu0
        %v857 = vadd.f32 %v561, %v856
        %v858 = vpop.f32.mrb[0].mxu0
        %v859 = vadd.f32 %v565, %v858
        %860 = vmatprep.mubr.bf16.mxu0 %v481
        %861 = vmatmul.mubr.bf16.gmra.mrb[0].mxu0 %v480
        %v862 = vpop.f32.mrb[0].mxu0
        %v863 = vadd.f32 %v561, %v862
        %v864 = vpop.f32.mrb[0].mxu0
        %v865 = vadd.f32 %v565, %v864
        %v866 = vpop.f32.mrb[0].mxu0
        %v867 = vadd.f32 %v561, %v866
        %v868 = vpop.f32.mrb[0].mxu0
        %v869 = vadd.f32 %v565, %v868
        %870 = vmatprep.mubr.bf16.mxu0 %v483
        %871 = vmatmul.mubr.bf16.gmra.mrb[0].mxu0 %v482
        %v872 = vpop.f32.mrb[0].mxu0
        %v873 = vadd.f32 %v561, %v872
        %v874 = vpop.f32.mrb[0].mxu0
        %v875 = vadd.f32 %v565, %v874
        %v876 = vpop.f32.mrb[0].mxu0
        %v877 = vadd.f32 %v561, %v876
        %v878 = vpop.f32.mrb[0].mxu0
        %v879 = vadd.f32 %v565, %v878
        %880 = vmatprep.mubr.bf16.mxu0 %v485
        %881 = vmatmul.mubr.bf16.gmra.mrb[0].mxu0 %v484
        %v882 = vpop.f32.mrb[0].mxu0
        %v883 = vadd.f32 %v561, %v882
        %v884 = vpop.f32.mrb[0].mxu0
        %v885 = vadd.f32 %v565, %v884
        %v886 = vpop.f32.mrb[0].mxu0
        %v887 = vadd.f32 %v561, %v886
        %v888 = vpop.f32.mrb[0].mxu0
        %v889 = vadd.f32 %v565, %v888
        %890 = vmatprep.mubr.bf16.mxu0 %v487
        %891 = vmatmul.mubr.bf16.gmra.mrb[0].mxu0 %v486
        %v892 = vpop.f32.mrb[0].mxu0
        %v893 = vadd.f32 %v561, %v892
        %v894 = vpop.f32.mrb[0].mxu0
        %v895 = vadd.f32 %v565, %v894
        %v896 = vpop.f32.mrb[0].mxu0
        %v897 = vadd.f32 %v561, %v896
        %v898 = vpop.f32.mrb[0].mxu0
        %v899 = vadd.f32 %v565, %v898
        %900 = vmatprep.mubr.bf16.mxu0 %v489
        %901 = vmatmul.mubr.bf16.gmra.mrb[0].mxu0 %v488
        %v902 = vpop.f32.mrb[0].mxu0
        %v903 = vadd.f32 %v561, %v902
        %v904 = vpop.f32.mrb[0].mxu0
        %v905 = vadd.f32 %v565, %v904
        %v906 = vpop.f32.mrb[0].mxu0
        %v907 = vadd.f32 %v561, %v906
        %v908 = vpop.f32.mrb[0].mxu0
        %v909 = vadd.f32 %v565, %v908
        %910 = vmatprep.mubr.bf16.mxu0 %v491
        %911 = vmatmul.mubr.bf16.gmra.mrb[0].mxu0 %v490
        %v912 = vpop.f32.mrb[0].mxu0
        %v913 = vadd.f32 %v561, %v912
        %v914 = vpop.f32.mrb[0].mxu0
        %v915 = vadd.f32 %v565, %v914
        %v916 = vpop.f32.mrb[0].mxu0
        %v917 = vadd.f32 %v561, %v916
        %v918 = vpop.f32.mrb[0].mxu0
        %v919 = vadd.f32 %v565, %v918
        %920 = vmatprep.mubr.bf16.mxu0 %v493
        %921 = vmatmul.mubr.bf16.gmra.mrb[0].mxu0 %v492
        %v922 = vpop.f32.mrb[0].mxu0
        %v923 = vadd.f32 %v561, %v922
        %v924 = vpop.f32.mrb[0].mxu0
        %v925 = vadd.f32 %v565, %v924
        %v926 = vpop.f32.mrb[0].mxu0
        %v927 = vadd.f32 %v561, %v926
        %v928 = vpop.f32.mrb[0].mxu0
        %v929 = vadd.f32 %v565, %v928
        %930 = vmatprep.mubr.bf16.mxu0 %v495
        %931 = vmatmul.mubr.bf16.gmra.mrb[0].mxu0 %v494
        %v932 = vpop.f32.mrb[0].mxu0
        %v933 = vadd.f32 %v561, %v932
        %v934 = vpop.f32.mrb[0].mxu0
        %v935 = vadd.f32 %v565, %v934
        %v936 = vpop.f32.mrb[0].mxu0
        %v937 = vadd.f32 %v561, %v936
        %v938 = vpop.f32.mrb[0].mxu0
        %v939 = vadd.f32 %v565, %v938
        %940 = vmatprep.mubr.bf16.mxu0 %v497
        %941 = vmatmul.mubr.bf16.gmra.mrb[0].mxu0 %v496
        %v942 = vpop.f32.mrb[0].mxu0
        %v943 = vadd.f32 %v561, %v942
        %v944 = vpop.f32.mrb[0].mxu0
        %v945 = vadd.f32 %v565, %v944
        %v946 = vpop.f32.mrb[0].mxu0
        %v947 = vadd.f32 %v561, %v946
        %v948 = vpop.f32.mrb[0].mxu0
        %v949 = vadd.f32 %v565, %v948
        %950 = vmatprep.mubr.bf16.mxu0 %v499
        %951 = vmatmul.mubr.bf16.gmra.mrb[0].mxu0 %v498
        %v952 = vpop.f32.mrb[0].mxu0
        %v953 = vadd.f32 %v561, %v952
        %v954 = vpop.f32.mrb[0].mxu0
        %v955 = vadd.f32 %v565, %v954
        %v956 = vpop.f32.mrb[0].mxu0
        %v957 = vadd.f32 %v561, %v956
        %v958 = vpop.f32.mrb[0].mxu0
        %v959 = vadd.f32 %v565, %v958
        %960 = vmatprep.mubr.bf16.mxu0 %v501
        %961 = vmatmul.mubr.bf16.gmra.mrb[0].mxu0 %v500
        %v962 = vpop.f32.mrb[0].mxu0
        %v963 = vadd.f32 %v561, %v962
        %v964 = vpop.f32.mrb[0].mxu0
        %v965 = vadd.f32 %v565, %v964
        %v966 = vpop.f32.mrb[0].mxu0
        %v967 = vadd.f32 %v561, %v966
        %v968 = vpop.f32.mrb[0].mxu0
        %v969 = vadd.f32 %v565, %v968
        %970 = vmatprep.mubr.bf16.mxu0 %v503
        %971 = vmatmul.mubr.bf16.gmra.mrb[0].mxu0 %v502
        %v972 = vpop.f32.mrb[0].mxu0
        %v973 = vadd.f32 %v561, %v972
        %v974 = vpop.f32.mrb[0].mxu0
        %v975 = vadd.f32 %v565, %v974
        %v976 = vpop.f32.mrb[0].mxu0
        %v977 = vadd.f32 %v561, %v976
        %v978 = vpop.f32.mrb[0].mxu0
        %v979 = vadd.f32 %v565, %v978
        %980 = vmatprep.mubr.bf16.mxu0 %v505
        %981 = vmatmul.mubr.bf16.gmra.mrb[0].mxu0 %v504
        %v982 = vpop.f32.mrb[0].mxu0
        %v983 = vadd.f32 %v561, %v982
        %v984 = vpop.f32.mrb[0].mxu0
        %v985 = vadd.f32 %v565, %v984
        %v986 = vpop.f32.mrb[0].mxu0
        %v987 = vadd.f32 %v561, %v986
        %v988 = vpop.f32.mrb[0].mxu0
        %v989 = vadd.f32 %v565, %v988
        %990 = vmatprep.mubr.bf16.mxu0 %v507
        %991 = vmatmul.mubr.bf16.gmra.mrb[0].mxu0 %v506
        %v992 = vpop.f32.mrb[0].mxu0
        %v993 = vadd.f32 %v561, %v992
        %v994 = vpop.f32.mrb[0].mxu0
        %v995 = vadd.f32 %v565, %v994
        %v996 = vpop.f32.mrb[0].mxu0
        %v997 = vadd.f32 %v561, %v996
        %v998 = vpop.f32.mrb[0].mxu0
        %v999 = vadd.f32 %v565, %v998
        %1000 = vmatprep.mubr.bf16.mxu0 %v509
        %1001 = vmatmul.mubr.bf16.gmra.mrb[0].mxu0 %v508
        %v1002 = vpop.f32.mrb[0].mxu0
        %v1003 = vadd.f32 %v561, %v1002
        %v1004 = vpop.f32.mrb[0].mxu0
        %v1005 = vadd.f32 %v565, %v1004
        %v1006 = vpop.f32.mrb[0].mxu0
        %v1007 = vadd.f32 %v561, %v1006
        %v1008 = vpop.f32.mrb[0].mxu0
        %v1009 = vadd.f32 %v565, %v1008
        %1010 = vmatprep.mubr.bf16.mxu0 %v511
        %1011 = vmatmul.mubr.bf16.gmra.mrb[0].mxu0 %v510
        %v1012 = vpop.f32.mrb[0].mxu0
        %v1013 = vadd.f32 %v561, %v1012
        %v1014 = vpop.f32.mrb[0].mxu0
        %v1015 = vadd.f32 %v565, %v1014
        %v1016 = vpop.f32.mrb[0].mxu0
        %v1017 = vadd.f32 %v561, %v1016
        %v1018 = vpop.f32.mrb[0].mxu0
        %v1019 = vadd.f32 %v565, %v1018
        %1020 = vmatprep.mubr.bf16.mxu0 %v513
        %1021 = vmatmul.mubr.bf16.gmra.mrb[0].mxu0 %v512
        %v1022 = vpop.f32.mrb[0].mxu0
        %v1023 = vadd.f32 %v561, %v1022
        %v1024 = vpop.f32.mrb[0].mxu0
        %v1025 = vadd.f32 %v565, %v1024
        %v1026 = vpop.f32.mrb[0].mxu0
        %v1027 = vadd.f32 %v561, %v1026
        %v1028 = vpop.f32.mrb[0].mxu0
        %v1029 = vadd.f32 %v565, %v1028
        %1030 = vmatprep.mubr.bf16.mxu0 %v515
        %1031 = vmatmul.mubr.bf16.gmra.mrb[0].mxu0 %v514
        %v1032 = vpop.f32.mrb[0].mxu0
        %v1033 = vadd.f32 %v561, %v1032
        %v1034 = vpop.f32.mrb[0].mxu0
        %v1035 = vadd.f32 %v565, %v1034
        %v1036 = vpop.f32.mrb[0].mxu0
        %v1037 = vadd.f32 %v561, %v1036
        %v1038 = vpop.f32.mrb[0].mxu0
        %v1039 = vadd.f32 %v565, %v1038
        %1040 = vmatprep.mubr.bf16.mxu0 %v517
        %1041 = vmatmul.mubr.bf16.gmra.mrb[0].mxu0 %v516
        %v1042 = vpop.f32.mrb[0].mxu0
        %v1043 = vadd.f32 %v561, %v1042
        %v1044 = vpop.f32.mrb[0].mxu0
        %v1045 = vadd.f32 %v565, %v1044
        %v1046 = vpop.f32.mrb[0].mxu0
        %v1047 = vadd.f32 %v561, %v1046
        %v1048 = vpop.f32.mrb[0].mxu0
        %v1049 = vadd.f32 %v565, %v1048
        %1050 = vmatprep.mubr.bf16.mxu0 %v519
        %1051 = vmatmul.mubr.bf16.gmra.mrb[0].mxu0 %v518
        %v1052 = vpop.f32.mrb[0].mxu0
        %v1053 = vadd.f32 %v561, %v1052
        %v1054 = vpop.f32.mrb[0].mxu0
        %v1055 = vadd.f32 %v565, %v1054
        %v1056 = vpop.f32.mrb[0].mxu0
        %v1057 = vadd.f32 %v561, %v1056
        %v1058 = vpop.f32.mrb[0].mxu0
        %v1059 = vadd.f32 %v565, %v1058
        %1060 = vmatprep.mubr.bf16.mxu0 %v521
        %1061 = vmatmul.mubr.bf16.gmra.mrb[0].mxu0 %v520
        %v1062 = vpop.f32.mrb[0].mxu0
        %v1063 = vadd.f32 %v561, %v1062
        %v1064 = vpop.f32.mrb[0].mxu0
        %v1065 = vadd.f32 %v565, %v1064
        %v1066 = vpop.f32.mrb[0].mxu0
        %v1067 = vadd.f32 %v561, %v1066
        %v1068 = vpop.f32.mrb[0].mxu0
        %v1069 = vadd.f32 %v565, %v1068
        %1070 = vmatprep.mubr.bf16.mxu0 %v523
        %1071 = vmatmul.mubr.bf16.gmra.mrb[0].mxu0 %v522
        %v1072 = vpop.f32.mrb[0].mxu0
        %v1073 = vadd.f32 %v561, %v1072
        %v1074 = vpop.f32.mrb[0].mxu0
        %v1075 = vadd.f32 %v565, %v1074
        %v1076 = vpop.f32.mrb[0].mxu0
        %v1077 = vadd.f32 %v561, %v1076
        %v1078 = vpop.f32.mrb[0].mxu0
        %v1079 = vadd.f32 %v565, %v1078
        %1080 = vdwg.mxu0
        %v1081 = vmax.f32 %v763, 0.0
        %v1082 = vmax.f32 %v765, 0.0
        %v1083 = vmax.f32 %v767, 0.0
        %v1084 = vmax.f32 %v769, 0.0
        %v1085 = vmax.f32 %v773, 0.0
        %v1086 = vmax.f32 %v775, 0.0
        %v1087 = vmax.f32 %v777, 0.0
        %v1088 = vmax.f32 %v779, 0.0
        %v1089 = vmax.f32 %v783, 0.0
        %v1090 = vmax.f32 %v785, 0.0
        %v1091 = vmax.f32 %v787, 0.0
        %v1092 = vmax.f32 %v789, 0.0
        %v1093 = vmax.f32 %v793, 0.0
        %v1094 = vmax.f32 %v795, 0.0
        %v1095 = vmax.f32 %v797, 0.0
        %v1096 = vmax.f32 %v799, 0.0
        %v1097 = vmax.f32 %v803, 0.0
        %v1098 = vmax.f32 %v805, 0.0
        %v1099 = vmax.f32 %v807, 0.0
        %v1100 = vmax.f32 %v809, 0.0
        %v1101 = vmax.f32 %v813, 0.0
        %v1102 = vmax.f32 %v815, 0.0
        %v1103 = vmax.f32 %v817, 0.0
        %v1104 = vmax.f32 %v819, 0.0
        %v1105 = vmax.f32 %v823, 0.0
        %v1106 = vmax.f32 %v825, 0.0
        %v1107 = vmax.f32 %v827, 0.0
        %v1108 = vmax.f32 %v829, 0.0
        %v1109 = vmax.f32 %v833, 0.0
        %v1110 = vmax.f32 %v835, 0.0
        %v1111 = vmax.f32 %v837, 0.0
        %v1112 = vmax.f32 %v839, 0.0
        %v1113 = vmax.f32 %v843, 0.0
        %v1114 = vmax.f32 %v845, 0.0
        %v1115 = vmax.f32 %v847, 0.0
        %v1116 = vmax.f32 %v849, 0.0
        %v1117 = vmax.f32 %v853, 0.0
        %v1118 = vmax.f32 %v855, 0.0
        %v1119 = vmax.f32 %v857, 0.0
        %v1120 = vmax.f32 %v859, 0.0
        %v1121 = vmax.f32 %v863, 0.0
        %v1122 = vmax.f32 %v865, 0.0
        %v1123 = vmax.f32 %v867, 0.0
        %v1124 = vmax.f32 %v869, 0.0
        %v1125 = vmax.f32 %v873, 0.0
        %v1126 = vmax.f32 %v875, 0.0
        %v1127 = vmax.f32 %v877, 0.0
        %v1128 = vmax.f32 %v879, 0.0
        %v1129 = vmax.f32 %v883, 0.0
        %v1130 = vmax.f32 %v885, 0.0
        %v1131 = vmax.f32 %v887, 0.0
        %v1132 = vmax.f32 %v889, 0.0
        %v1133 = vmax.f32 %v893, 0.0
        %v1134 = vmax.f32 %v895, 0.0
        %v1135 = vmax.f32 %v897, 0.0
        %v1136 = vmax.f32 %v899, 0.0
        %v1137 = vmax.f32 %v903, 0.0
        %v1138 = vmax.f32 %v905, 0.0
        %v1139 = vmax.f32 %v907, 0.0
        %v1140 = vmax.f32 %v909, 0.0
        %v1141 = vmax.f32 %v913, 0.0
        %v1142 = vmax.f32 %v915, 0.0
        %v1143 = vmax.f32 %v917, 0.0
        %v1144 = vmax.f32 %v919, 0.0
        %v1145 = vmax.f32 %v923, 0.0
        %v1146 = vmax.f32 %v925, 0.0
        %v1147 = vmax.f32 %v927, 0.0
        %v1148 = vmax.f32 %v929, 0.0
        %v1149 = vmax.f32 %v933, 0.0
        %v1150 = vmax.f32 %v935, 0.0
        %v1151 = vmax.f32 %v937, 0.0
        %v1152 = vmax.f32 %v939, 0.0
        %v1153 = vmax.f32 %v943, 0.0
        %v1154 = vmax.f32 %v945, 0.0
        %v1155 = vmax.f32 %v947, 0.0
        %v1156 = vmax.f32 %v949, 0.0
        %v1157 = vmax.f32 %v953, 0.0
        %v1158 = vmax.f32 %v955, 0.0
        %v1159 = vmax.f32 %v957, 0.0
        %v1160 = vmax.f32 %v959, 0.0
        %v1161 = vmax.f32 %v963, 0.0
        %v1162 = vmax.f32 %v965, 0.0
        %v1163 = vmax.f32 %v967, 0.0
        %v1164 = vmax.f32 %v969, 0.0
        %v1165 = vmax.f32 %v973, 0.0
        %v1166 = vmax.f32 %v975, 0.0
        %v1167 = vmax.f32 %v977, 0.0
        %v1168 = vmax.f32 %v979, 0.0
        %v1169 = vmax.f32 %v983, 0.0
        %v1170 = vmax.f32 %v985, 0.0
        %v1171 = vmax.f32 %v987, 0.0
        %v1172 = vmax.f32 %v989, 0.0
        %v1173 = vmax.f32 %v993, 0.0
        %v1174 = vmax.f32 %v995, 0.0
        %v1175 = vmax.f32 %v997, 0.0
        %v1176 = vmax.f32 %v999, 0.0
        %v1177 = vmax.f32 %v1003, 0.0
        %v1178 = vmax.f32 %v1005, 0.0
        %v1179 = vmax.f32 %v1007, 0.0
        %v1180 = vmax.f32 %v1009, 0.0
        %v1181 = vmax.f32 %v1013, 0.0
        %v1182 = vmax.f32 %v1015, 0.0
        %v1183 = vmax.f32 %v1017, 0.0
        %v1184 = vmax.f32 %v1019, 0.0
        %v1185 = vmax.f32 %v1023, 0.0
        %v1186 = vmax.f32 %v1025, 0.0
        %v1187 = vmax.f32 %v1027, 0.0
        %v1188 = vmax.f32 %v1029, 0.0
        %v1189 = vmax.f32 %v1033, 0.0
        %v1190 = vmax.f32 %v1035, 0.0
        %v1191 = vmax.f32 %v1037, 0.0
        %v1192 = vmax.f32 %v1039, 0.0
        %v1193 = vmax.f32 %v1043, 0.0
        %v1194 = vmax.f32 %v1045, 0.0
        %v1195 = vmax.f32 %v1047, 0.0
        %v1196 = vmax.f32 %v1049, 0.0
        %v1197 = vmax.f32 %v1053, 0.0
        %v1198 = vmax.f32 %v1055, 0.0
        %v1199 = vmax.f32 %v1057, 0.0
        %v1200 = vmax.f32 %v1059, 0.0
        %v1201 = vmax.f32 %v1063, 0.0
        %v1202 = vmax.f32 %v1065, 0.0
        %v1203 = vmax.f32 %v1067, 0.0
        %v1204 = vmax.f32 %v1069, 0.0
        %v1205 = vmax.f32 %v1073, 0.0
        %v1206 = vmax.f32 %v1075, 0.0
        %v1207 = vmax.f32 %v1077, 0.0
        %v1208 = vmax.f32 %v1079, 0.0
        %v1209 = vpack.c.bf16 %v1083, %v1081
        %v1210 = vpack.c.bf16 %v1084, %v1082
        %v1211 = vpack.c.bf16 %v1087, %v1085
        %v1212 = vpack.c.bf16 %v1088, %v1086
        %v1213 = vpack.c.bf16 %v1091, %v1089
        %v1214 = vpack.c.bf16 %v1092, %v1090
        %v1215 = vpack.c.bf16 %v1095, %v1093
        %v1216 = vpack.c.bf16 %v1096, %v1094
        %v1217 = vpack.c.bf16 %v1099, %v1097
        %v1218 = vpack.c.bf16 %v1100, %v1098
        %v1219 = vpack.c.bf16 %v1103, %v1101
        %v1220 = vpack.c.bf16 %v1104, %v1102
        %v1221 = vpack.c.bf16 %v1107, %v1105
        %v1222 = vpack.c.bf16 %v1108, %v1106
        %v1223 = vpack.c.bf16 %v1111, %v1109
        %v1224 = vpack.c.bf16 %v1112, %v1110
        %v1225 = vpack.c.bf16 %v1115, %v1113
        %v1226 = vpack.c.bf16 %v1116, %v1114
        %v1227 = vpack.c.bf16 %v1119, %v1117
        %v1228 = vpack.c.bf16 %v1120, %v1118
        %v1229 = vpack.c.bf16 %v1123, %v1121
        %v1230 = vpack.c.bf16 %v1124, %v1122
        %v1231 = vpack.c.bf16 %v1127, %v1125
        %v1232 = vpack.c.bf16 %v1128, %v1126
        %v1233 = vpack.c.bf16 %v1131, %v1129
        %v1234 = vpack.c.bf16 %v1132, %v1130
        %v1235 = vpack.c.bf16 %v1135, %v1133
        %v1236 = vpack.c.bf16 %v1136, %v1134
        %v1237 = vpack.c.bf16 %v1139, %v1137
        %v1238 = vpack.c.bf16 %v1140, %v1138
        %v1239 = vpack.c.bf16 %v1143, %v1141
        %v1240 = vpack.c.bf16 %v1144, %v1142
        %v1241 = vpack.c.bf16 %v1147, %v1145
        %v1242 = vpack.c.bf16 %v1148, %v1146
        %v1243 = vpack.c.bf16 %v1151, %v1149
        %v1244 = vpack.c.bf16 %v1152, %v1150
        %v1245 = vpack.c.bf16 %v1155, %v1153
        %v1246 = vpack.c.bf16 %v1156, %v1154
        %v1247 = vpack.c.bf16 %v1159, %v1157
        %v1248 = vpack.c.bf16 %v1160, %v1158
        %v1249 = vpack.c.bf16 %v1163, %v1161
        %v1250 = vpack.c.bf16 %v1164, %v1162
        %v1251 = vpack.c.bf16 %v1167, %v1165
        %v1252 = vpack.c.bf16 %v1168, %v1166
        %v1253 = vpack.c.bf16 %v1171, %v1169
        %v1254 = vpack.c.bf16 %v1172, %v1170
        %v1255 = vpack.c.bf16 %v1175, %v1173
        %v1256 = vpack.c.bf16 %v1176, %v1174
        %v1257 = vpack.c.bf16 %v1179, %v1177
        %v1258 = vpack.c.bf16 %v1180, %v1178
        %v1259 = vpack.c.bf16 %v1183, %v1181
        %v1260 = vpack.c.bf16 %v1184, %v1182
        %v1261 = vpack.c.bf16 %v1187, %v1185
        %v1262 = vpack.c.bf16 %v1188, %v1186
        %v1263 = vpack.c.bf16 %v1191, %v1189
        %v1264 = vpack.c.bf16 %v1192, %v1190
        %v1265 = vpack.c.bf16 %v1195, %v1193
        %v1266 = vpack.c.bf16 %v1196, %v1194
        %v1267 = vpack.c.bf16 %v1199, %v1197
        %v1268 = vpack.c.bf16 %v1200, %v1198
        %v1269 = vpack.c.bf16 %v1203, %v1201
        %v1270 = vpack.c.bf16 %v1204, %v1202
        %v1271 = vpack.c.bf16 %v1207, %v1205
        %v1272 = vpack.c.bf16 %v1208, %v1206
        %v1273 = vld [vmem:[#allocation6] sm:$0xff]
        %v1274 = vld [vmem:[#allocation6 + $0x8] sm:$0xff]
        %v1275 = vld [vmem:[#allocation6 + $0x10] sm:$0xff]
        %v1276 = vld [vmem:[#allocation6 + $0x18] sm:$0xff]
        %v1277 = vld [vmem:[#allocation6 + $0x20] sm:$0xff]
        %v1278 = vld [vmem:[#allocation6 + $0x28] sm:$0xff]
        %v1279 = vld [vmem:[#allocation6 + $0x30] sm:$0xff]
        %v1280 = vld [vmem:[#allocation6 + $0x38] sm:$0xff]
        %v1281 = vld [vmem:[#allocation6 + $0x40] sm:$0xff]
        %v1282 = vld [vmem:[#allocation6 + $0x48] sm:$0xff]
        %v1283 = vld [vmem:[#allocation6 + $0x50] sm:$0xff]
        %v1284 = vld [vmem:[#allocation6 + $0x58] sm:$0xff]
        %v1285 = vld [vmem:[#allocation6 + $0x60] sm:$0xff]
        %v1286 = vld [vmem:[#allocation6 + $0x68] sm:$0xff]
        %v1287 = vld [vmem:[#allocation6 + $0x70] sm:$0xff]
        %v1288 = vld [vmem:[#allocation6 + $0x78] sm:$0xff]
        %v1289 = vld [vmem:[#allocation6 + $0x80] sm:$0xff]
        %v1290 = vld [vmem:[#allocation6 + $0x88] sm:$0xff]
        %v1291 = vld [vmem:[#allocation6 + $0x90] sm:$0xff]
        %v1292 = vld [vmem:[#allocation6 + $0x98] sm:$0xff]
        %v1293 = vld [vmem:[#allocation6 + $0xa0] sm:$0xff]
        %v1294 = vld [vmem:[#allocation6 + $0xa8] sm:$0xff]
        %v1295 = vld [vmem:[#allocation6 + $0xb0] sm:$0xff]
        %v1296 = vld [vmem:[#allocation6 + $0xb8] sm:$0xff]
        %v1297 = vld [vmem:[#allocation6 + $0xc0] sm:$0xff]
        %v1298 = vld [vmem:[#allocation6 + $0xc8] sm:$0xff]
        %v1299 = vld [vmem:[#allocation6 + $0xd0] sm:$0xff]
        %v1300 = vld [vmem:[#allocation6 + $0xd8] sm:$0xff]
        %v1301 = vld [vmem:[#allocation6 + $0xe0] sm:$0xff]
        %v1302 = vld [vmem:[#allocation6 + $0xe8] sm:$0xff]
        %v1303 = vld [vmem:[#allocation6 + $0xf0] sm:$0xff]
        %v1304 = vld [vmem:[#allocation6 + $0xf8] sm:$0xff]
        %v1305 = vld [vmem:[%s4] sm:$0x3]
        %v1307 = vlaneseq
        %v1308 = vshrl.u32 %v1307, 7
        %v1309 = vsub.s32 0, %v1308
        %v1310 = vrot.slane %v1305, %v1309
        %v1311 = vlaneseq
        %v1312 = vshrl.u32 %v1311, 7
        %v1313 = vsub.s32 1, %v1312
        %v1314 = vrot.slane %v1305, %v1313
        %v1349 = vunpack.c.l.b16 %v1273
        %v1350 = vunpack.c.h.b16 %v1273
        %v1351 = vunpack.c.l.b16 %v1274
        %v1352 = vunpack.c.h.b16 %v1274
        %v1353 = vunpack.c.l.b16 %v1275
        %v1354 = vunpack.c.h.b16 %v1275
        %v1355 = vunpack.c.l.b16 %v1276
        %v1356 = vunpack.c.h.b16 %v1276
        %v1357 = vunpack.c.l.b16 %v1277
        %v1358 = vunpack.c.h.b16 %v1277
        %v1359 = vunpack.c.l.b16 %v1278
        %v1360 = vunpack.c.h.b16 %v1278
        %v1361 = vunpack.c.l.b16 %v1279
        %v1362 = vunpack.c.h.b16 %v1279
        %v1363 = vunpack.c.l.b16 %v1280
        %v1364 = vunpack.c.h.b16 %v1280
        %v1365 = vunpack.c.l.b16 %v1281
        %v1366 = vunpack.c.h.b16 %v1281
        %v1367 = vunpack.c.l.b16 %v1282
        %v1368 = vunpack.c.h.b16 %v1282
        %v1369 = vunpack.c.l.b16 %v1283
        %v1370 = vunpack.c.h.b16 %v1283
        %v1371 = vunpack.c.l.b16 %v1284
        %v1372 = vunpack.c.h.b16 %v1284
        %v1373 = vunpack.c.l.b16 %v1285
        %v1374 = vunpack.c.h.b16 %v1285
        %v1375 = vunpack.c.l.b16 %v1286
        %v1376 = vunpack.c.h.b16 %v1286
        %v1377 = vunpack.c.l.b16 %v1287
        %v1378 = vunpack.c.h.b16 %v1287
        %v1379 = vunpack.c.l.b16 %v1288
        %v1380 = vunpack.c.h.b16 %v1288
        %v1381 = vunpack.c.l.b16 %v1289
        %v1382 = vunpack.c.h.b16 %v1289
        %v1383 = vunpack.c.l.b16 %v1290
        %v1384 = vunpack.c.h.b16 %v1290
        %v1385 = vunpack.c.l.b16 %v1291
        %v1386 = vunpack.c.h.b16 %v1291
        %v1387 = vunpack.c.l.b16 %v1292
        %v1388 = vunpack.c.h.b16 %v1292
        %v1389 = vunpack.c.l.b16 %v1293
        %v1390 = vunpack.c.h.b16 %v1293
        %v1391 = vunpack.c.l.b16 %v1294
        %v1392 = vunpack.c.h.b16 %v1294
        %v1393 = vunpack.c.l.b16 %v1295
        %v1394 = vunpack.c.h.b16 %v1295
        %v1395 = vunpack.c.l.b16 %v1296
        %v1396 = vunpack.c.h.b16 %v1296
        %v1397 = vunpack.c.l.b16 %v1297
        %v1398 = vunpack.c.h.b16 %v1297
        %v1399 = vunpack.c.l.b16 %v1298
        %v1400 = vunpack.c.h.b16 %v1298
        %v1401 = vunpack.c.l.b16 %v1299
        %v1402 = vunpack.c.h.b16 %v1299
        %v1403 = vunpack.c.l.b16 %v1300
        %v1404 = vunpack.c.h.b16 %v1300
        %v1405 = vunpack.c.l.b16 %v1301
        %v1406 = vunpack.c.h.b16 %v1301
        %v1407 = vunpack.c.l.b16 %v1302
        %v1408 = vunpack.c.h.b16 %v1302
        %v1409 = vunpack.c.l.b16 %v1303
        %v1410 = vunpack.c.h.b16 %v1303
        %v1411 = vunpack.c.l.b16 %v1304
        %v1412 = vunpack.c.h.b16 %v1304
        %v1413 = vpack.c.b16 %v1351, %v1349
        %v1414 = vpack.c.b16 %v1352, %v1350
        %v1415 = vpack.c.b16 %v1355, %v1353
        %v1416 = vpack.c.b16 %v1356, %v1354
        %v1417 = vpack.c.b16 %v1359, %v1357
        %v1418 = vpack.c.b16 %v1360, %v1358
        %v1419 = vpack.c.b16 %v1363, %v1361
        %v1420 = vpack.c.b16 %v1364, %v1362
        %v1421 = vpack.c.b16 %v1367, %v1365
        %v1422 = vpack.c.b16 %v1368, %v1366
        %v1423 = vpack.c.b16 %v1371, %v1369
        %v1424 = vpack.c.b16 %v1372, %v1370
        %v1425 = vpack.c.b16 %v1375, %v1373
        %v1426 = vpack.c.b16 %v1376, %v1374
        %v1427 = vpack.c.b16 %v1379, %v1377
        %v1428 = vpack.c.b16 %v1380, %v1378
        %v1429 = vpack.c.b16 %v1383, %v1381
        %v1430 = vpack.c.b16 %v1384, %v1382
        %v1431 = vpack.c.b16 %v1387, %v1385
        %v1432 = vpack.c.b16 %v1388, %v1386
        %v1433 = vpack.c.b16 %v1391, %v1389
        %v1434 = vpack.c.b16 %v1392, %v1390
        %v1435 = vpack.c.b16 %v1395, %v1393
        %v1436 = vpack.c.b16 %v1396, %v1394
        %v1437 = vpack.c.b16 %v1399, %v1397
        %v1438 = vpack.c.b16 %v1400, %v1398
        %v1439 = vpack.c.b16 %v1403, %v1401
        %v1440 = vpack.c.b16 %v1404, %v1402
        %v1441 = vpack.c.b16 %v1407, %v1405
        %v1442 = vpack.c.b16 %v1408, %v1406
        %v1443 = vpack.c.b16 %v1411, %v1409
        %v1444 = vpack.c.b16 %v1412, %v1410
        %1477 = vmatprep.subr.bf16.mxu0 %v1414
        %1478 = vmatpush1.bf16.msra.mxu0 %v1413
        %1479 = vmatprep.subr.bf16.mxu0 %v1416
        %1480 = vmatpush1.bf16.msra.mxu0 %v1415
        %1481 = vmatprep.subr.bf16.mxu0 %v1418
        %1482 = vmatpush1.bf16.msra.mxu0 %v1417
        %1483 = vmatprep.subr.bf16.mxu0 %v1420
        %1484 = vmatpush1.bf16.msra.mxu0 %v1419
        %1485 = vmatprep.subr.bf16.mxu0 %v1422
        %1486 = vmatpush1.bf16.msra.mxu0 %v1421
        %1487 = vmatprep.subr.bf16.mxu0 %v1424
        %1488 = vmatpush1.bf16.msra.mxu0 %v1423
        %1489 = vmatprep.subr.bf16.mxu0 %v1426
        %1490 = vmatpush1.bf16.msra.mxu0 %v1425
        %1491 = vmatprep.subr.bf16.mxu0 %v1428
        %1492 = vmatpush1.bf16.msra.mxu0 %v1427
        %1493 = vmatprep.subr.bf16.mxu0 %v1430
        %1494 = vmatpush1.bf16.msra.mxu0 %v1429
        %1495 = vmatprep.subr.bf16.mxu0 %v1432
        %1496 = vmatpush1.bf16.msra.mxu0 %v1431
        %1497 = vmatprep.subr.bf16.mxu0 %v1434
        %1498 = vmatpush1.bf16.msra.mxu0 %v1433
        %1499 = vmatprep.subr.bf16.mxu0 %v1436
        %1500 = vmatpush1.bf16.msra.mxu0 %v1435
        %1501 = vmatprep.subr.bf16.mxu0 %v1438
        %1502 = vmatpush1.bf16.msra.mxu0 %v1437
        %1503 = vmatprep.subr.bf16.mxu0 %v1440
        %1504 = vmatpush1.bf16.msra.mxu0 %v1439
        %1505 = vmatprep.subr.bf16.mxu0 %v1442
        %1506 = vmatpush1.bf16.msra.mxu0 %v1441
        %1507 = vmatprep.subr.bf16.mxu0 %v1444
        %1508 = vmatpush1.bf16.msra.mxu0 %v1443
        %1509 = vmatprep.mubr.bf16.mxu0 %v1210
        %1510 = vmatmul.mubr.bf16.gmra.mrb[0].mxu0 %v1209
        %v1511 = vpop.f32.mrb[0].mxu0
        %v1512 = vadd.f32 %v1310, %v1511
        %v1513 = vpop.f32.mrb[0].mxu0
        %v1514 = vadd.f32 %v1314, %v1513
        %v1515 = vpop.f32.mrb[0].mxu0
        %v1516 = vadd.f32 %v1310, %v1515
        %v1517 = vpop.f32.mrb[0].mxu0
        %v1518 = vadd.f32 %v1314, %v1517
        %1519 = vmatprep.mubr.bf16.mxu0 %v1212
        %1520 = vmatmul.mubr.bf16.gmra.mrb[0].mxu0 %v1211
        %v1521 = vpop.f32.mrb[0].mxu0
        %v1522 = vadd.f32 %v1310, %v1521
        %v1523 = vpop.f32.mrb[0].mxu0
        %v1524 = vadd.f32 %v1314, %v1523
        %v1525 = vpop.f32.mrb[0].mxu0
        %v1526 = vadd.f32 %v1310, %v1525
        %v1527 = vpop.f32.mrb[0].mxu0
        %v1528 = vadd.f32 %v1314, %v1527
        %1529 = vmatprep.mubr.bf16.mxu0 %v1214
        %1530 = vmatmul.mubr.bf16.gmra.mrb[0].mxu0 %v1213
        %v1531 = vpop.f32.mrb[0].mxu0
        %v1532 = vadd.f32 %v1310, %v1531
        %v1533 = vpop.f32.mrb[0].mxu0
        %v1534 = vadd.f32 %v1314, %v1533
        %v1535 = vpop.f32.mrb[0].mxu0
        %v1536 = vadd.f32 %v1310, %v1535
        %v1537 = vpop.f32.mrb[0].mxu0
        %v1538 = vadd.f32 %v1314, %v1537
        %1539 = vmatprep.mubr.bf16.mxu0 %v1216
        %1540 = vmatmul.mubr.bf16.gmra.mrb[0].mxu0 %v1215
        %v1541 = vpop.f32.mrb[0].mxu0
        %v1542 = vadd.f32 %v1310, %v1541
        %v1543 = vpop.f32.mrb[0].mxu0
        %v1544 = vadd.f32 %v1314, %v1543
        %v1545 = vpop.f32.mrb[0].mxu0
        %v1546 = vadd.f32 %v1310, %v1545
        %v1547 = vpop.f32.mrb[0].mxu0
        %v1548 = vadd.f32 %v1314, %v1547
        %1549 = vmatprep.mubr.bf16.mxu0 %v1218
        %1550 = vmatmul.mubr.bf16.gmra.mrb[0].mxu0 %v1217
        %v1551 = vpop.f32.mrb[0].mxu0
        %v1552 = vadd.f32 %v1310, %v1551
        %v1553 = vpop.f32.mrb[0].mxu0
        %v1554 = vadd.f32 %v1314, %v1553
        %v1555 = vpop.f32.mrb[0].mxu0
        %v1556 = vadd.f32 %v1310, %v1555
        %v1557 = vpop.f32.mrb[0].mxu0
        %v1558 = vadd.f32 %v1314, %v1557
        %1559 = vmatprep.mubr.bf16.mxu0 %v1220
        %1560 = vmatmul.mubr.bf16.gmra.mrb[0].mxu0 %v1219
        %v1561 = vpop.f32.mrb[0].mxu0
        %v1562 = vadd.f32 %v1310, %v1561
        %v1563 = vpop.f32.mrb[0].mxu0
        %v1564 = vadd.f32 %v1314, %v1563
        %v1565 = vpop.f32.mrb[0].mxu0
        %v1566 = vadd.f32 %v1310, %v1565
        %v1567 = vpop.f32.mrb[0].mxu0
        %v1568 = vadd.f32 %v1314, %v1567
        %1569 = vmatprep.mubr.bf16.mxu0 %v1222
        %1570 = vmatmul.mubr.bf16.gmra.mrb[0].mxu0 %v1221
        %v1571 = vpop.f32.mrb[0].mxu0
        %v1572 = vadd.f32 %v1310, %v1571
        %v1573 = vpop.f32.mrb[0].mxu0
        %v1574 = vadd.f32 %v1314, %v1573
        %v1575 = vpop.f32.mrb[0].mxu0
        %v1576 = vadd.f32 %v1310, %v1575
        %v1577 = vpop.f32.mrb[0].mxu0
        %v1578 = vadd.f32 %v1314, %v1577
        %1579 = vmatprep.mubr.bf16.mxu0 %v1224
        %1580 = vmatmul.mubr.bf16.gmra.mrb[0].mxu0 %v1223
        %v1581 = vpop.f32.mrb[0].mxu0
        %v1582 = vadd.f32 %v1310, %v1581
        %v1583 = vpop.f32.mrb[0].mxu0
        %v1584 = vadd.f32 %v1314, %v1583
        %v1585 = vpop.f32.mrb[0].mxu0
        %v1586 = vadd.f32 %v1310, %v1585
        %v1587 = vpop.f32.mrb[0].mxu0
        %v1588 = vadd.f32 %v1314, %v1587
        %1589 = vmatprep.mubr.bf16.mxu0 %v1226
        %1590 = vmatmul.mubr.bf16.gmra.mrb[0].mxu0 %v1225
        %v1591 = vpop.f32.mrb[0].mxu0
        %v1592 = vadd.f32 %v1310, %v1591
        %v1593 = vpop.f32.mrb[0].mxu0
        %v1594 = vadd.f32 %v1314, %v1593
        %v1595 = vpop.f32.mrb[0].mxu0
        %v1596 = vadd.f32 %v1310, %v1595
        %v1597 = vpop.f32.mrb[0].mxu0
        %v1598 = vadd.f32 %v1314, %v1597
        %1599 = vmatprep.mubr.bf16.mxu0 %v1228
        %1600 = vmatmul.mubr.bf16.gmra.mrb[0].mxu0 %v1227
        %v1601 = vpop.f32.mrb[0].mxu0
        %v1602 = vadd.f32 %v1310, %v1601
        %v1603 = vpop.f32.mrb[0].mxu0
        %v1604 = vadd.f32 %v1314, %v1603
        %v1605 = vpop.f32.mrb[0].mxu0
        %v1606 = vadd.f32 %v1310, %v1605
        %v1607 = vpop.f32.mrb[0].mxu0
        %v1608 = vadd.f32 %v1314, %v1607
        %1609 = vmatprep.mubr.bf16.mxu0 %v1230
        %1610 = vmatmul.mubr.bf16.gmra.mrb[0].mxu0 %v1229
        %v1611 = vpop.f32.mrb[0].mxu0
        %v1612 = vadd.f32 %v1310, %v1611
        %v1613 = vpop.f32.mrb[0].mxu0
        %v1614 = vadd.f32 %v1314, %v1613
        %v1615 = vpop.f32.mrb[0].mxu0
        %v1616 = vadd.f32 %v1310, %v1615
        %v1617 = vpop.f32.mrb[0].mxu0
        %v1618 = vadd.f32 %v1314, %v1617
        %1619 = vmatprep.mubr.bf16.mxu0 %v1232
        %1620 = vmatmul.mubr.bf16.gmra.mrb[0].mxu0 %v1231
        %v1621 = vpop.f32.mrb[0].mxu0
        %v1622 = vadd.f32 %v1310, %v1621
        %v1623 = vpop.f32.mrb[0].mxu0
        %v1624 = vadd.f32 %v1314, %v1623
        %v1625 = vpop.f32.mrb[0].mxu0
        %v1626 = vadd.f32 %v1310, %v1625
        %v1627 = vpop.f32.mrb[0].mxu0
        %v1628 = vadd.f32 %v1314, %v1627
        %1629 = vmatprep.mubr.bf16.mxu0 %v1234
        %1630 = vmatmul.mubr.bf16.gmra.mrb[0].mxu0 %v1233
        %v1631 = vpop.f32.mrb[0].mxu0
        %v1632 = vadd.f32 %v1310, %v1631
        %v1633 = vpop.f32.mrb[0].mxu0
        %v1634 = vadd.f32 %v1314, %v1633
        %v1635 = vpop.f32.mrb[0].mxu0
        %v1636 = vadd.f32 %v1310, %v1635
        %v1637 = vpop.f32.mrb[0].mxu0
        %v1638 = vadd.f32 %v1314, %v1637
        %1639 = vmatprep.mubr.bf16.mxu0 %v1236
        %1640 = vmatmul.mubr.bf16.gmra.mrb[0].mxu0 %v1235
        %v1641 = vpop.f32.mrb[0].mxu0
        %v1642 = vadd.f32 %v1310, %v1641
        %v1643 = vpop.f32.mrb[0].mxu0
        %v1644 = vadd.f32 %v1314, %v1643
        %v1645 = vpop.f32.mrb[0].mxu0
        %v1646 = vadd.f32 %v1310, %v1645
        %v1647 = vpop.f32.mrb[0].mxu0
        %v1648 = vadd.f32 %v1314, %v1647
        %1649 = vmatprep.mubr.bf16.mxu0 %v1238
        %1650 = vmatmul.mubr.bf16.gmra.mrb[0].mxu0 %v1237
        %v1651 = vpop.f32.mrb[0].mxu0
        %v1652 = vadd.f32 %v1310, %v1651
        %v1653 = vpop.f32.mrb[0].mxu0
        %v1654 = vadd.f32 %v1314, %v1653
        %v1655 = vpop.f32.mrb[0].mxu0
        %v1656 = vadd.f32 %v1310, %v1655
        %v1657 = vpop.f32.mrb[0].mxu0
        %v1658 = vadd.f32 %v1314, %v1657
        %1659 = vmatprep.mubr.bf16.mxu0 %v1240
        %1660 = vmatmul.mubr.bf16.gmra.mrb[0].mxu0 %v1239
        %v1661 = vpop.f32.mrb[0].mxu0
        %v1662 = vadd.f32 %v1310, %v1661
        %v1663 = vpop.f32.mrb[0].mxu0
        %v1664 = vadd.f32 %v1314, %v1663
        %v1665 = vpop.f32.mrb[0].mxu0
        %v1666 = vadd.f32 %v1310, %v1665
        %v1667 = vpop.f32.mrb[0].mxu0
        %v1668 = vadd.f32 %v1314, %v1667
        %1669 = vmatprep.mubr.bf16.mxu0 %v1242
        %1670 = vmatmul.mubr.bf16.gmra.mrb[0].mxu0 %v1241
        %v1671 = vpop.f32.mrb[0].mxu0
        %v1672 = vadd.f32 %v1310, %v1671
        %v1673 = vpop.f32.mrb[0].mxu0
        %v1674 = vadd.f32 %v1314, %v1673
        %v1675 = vpop.f32.mrb[0].mxu0
        %v1676 = vadd.f32 %v1310, %v1675
        %v1677 = vpop.f32.mrb[0].mxu0
        %v1678 = vadd.f32 %v1314, %v1677
        %1679 = vmatprep.mubr.bf16.mxu0 %v1244
        %1680 = vmatmul.mubr.bf16.gmra.mrb[0].mxu0 %v1243
        %v1681 = vpop.f32.mrb[0].mxu0
        %v1682 = vadd.f32 %v1310, %v1681
        %v1683 = vpop.f32.mrb[0].mxu0
        %v1684 = vadd.f32 %v1314, %v1683
        %v1685 = vpop.f32.mrb[0].mxu0
        %v1686 = vadd.f32 %v1310, %v1685
        %v1687 = vpop.f32.mrb[0].mxu0
        %v1688 = vadd.f32 %v1314, %v1687
        %1689 = vmatprep.mubr.bf16.mxu0 %v1246
        %1690 = vmatmul.mubr.bf16.gmra.mrb[0].mxu0 %v1245
        %v1691 = vpop.f32.mrb[0].mxu0
        %v1692 = vadd.f32 %v1310, %v1691
        %v1693 = vpop.f32.mrb[0].mxu0
        %v1694 = vadd.f32 %v1314, %v1693
        %v1695 = vpop.f32.mrb[0].mxu0
        %v1696 = vadd.f32 %v1310, %v1695
        %v1697 = vpop.f32.mrb[0].mxu0
        %v1698 = vadd.f32 %v1314, %v1697
        %1699 = vmatprep.mubr.bf16.mxu0 %v1248
        %1700 = vmatmul.mubr.bf16.gmra.mrb[0].mxu0 %v1247
        %v1701 = vpop.f32.mrb[0].mxu0
        %v1702 = vadd.f32 %v1310, %v1701
        %v1703 = vpop.f32.mrb[0].mxu0
        %v1704 = vadd.f32 %v1314, %v1703
        %v1705 = vpop.f32.mrb[0].mxu0
        %v1706 = vadd.f32 %v1310, %v1705
        %v1707 = vpop.f32.mrb[0].mxu0
        %v1708 = vadd.f32 %v1314, %v1707
        %1709 = vmatprep.mubr.bf16.mxu0 %v1250
        %1710 = vmatmul.mubr.bf16.gmra.mrb[0].mxu0 %v1249
        %v1711 = vpop.f32.mrb[0].mxu0
        %v1712 = vadd.f32 %v1310, %v1711
        %v1713 = vpop.f32.mrb[0].mxu0
        %v1714 = vadd.f32 %v1314, %v1713
        %v1715 = vpop.f32.mrb[0].mxu0
        %v1716 = vadd.f32 %v1310, %v1715
        %v1717 = vpop.f32.mrb[0].mxu0
        %v1718 = vadd.f32 %v1314, %v1717
        %1719 = vmatprep.mubr.bf16.mxu0 %v1252
        %1720 = vmatmul.mubr.bf16.gmra.mrb[0].mxu0 %v1251
        %v1721 = vpop.f32.mrb[0].mxu0
        %v1722 = vadd.f32 %v1310, %v1721
        %v1723 = vpop.f32.mrb[0].mxu0
        %v1724 = vadd.f32 %v1314, %v1723
        %v1725 = vpop.f32.mrb[0].mxu0
        %v1726 = vadd.f32 %v1310, %v1725
        %v1727 = vpop.f32.mrb[0].mxu0
        %v1728 = vadd.f32 %v1314, %v1727
        %1729 = vmatprep.mubr.bf16.mxu0 %v1254
        %1730 = vmatmul.mubr.bf16.gmra.mrb[0].mxu0 %v1253
        %v1731 = vpop.f32.mrb[0].mxu0
        %v1732 = vadd.f32 %v1310, %v1731
        %v1733 = vpop.f32.mrb[0].mxu0
        %v1734 = vadd.f32 %v1314, %v1733
        %v1735 = vpop.f32.mrb[0].mxu0
        %v1736 = vadd.f32 %v1310, %v1735
        %v1737 = vpop.f32.mrb[0].mxu0
        %v1738 = vadd.f32 %v1314, %v1737
        %1739 = vmatprep.mubr.bf16.mxu0 %v1256
        %1740 = vmatmul.mubr.bf16.gmra.mrb[0].mxu0 %v1255
        %v1741 = vpop.f32.mrb[0].mxu0
        %v1742 = vadd.f32 %v1310, %v1741
        %v1743 = vpop.f32.mrb[0].mxu0
        %v1744 = vadd.f32 %v1314, %v1743
        %v1745 = vpop.f32.mrb[0].mxu0
        %v1746 = vadd.f32 %v1310, %v1745
        %v1747 = vpop.f32.mrb[0].mxu0
        %v1748 = vadd.f32 %v1314, %v1747
        %1749 = vmatprep.mubr.bf16.mxu0 %v1258
        %1750 = vmatmul.mubr.bf16.gmra.mrb[0].mxu0 %v1257
        %v1751 = vpop.f32.mrb[0].mxu0
        %v1752 = vadd.f32 %v1310, %v1751
        %v1753 = vpop.f32.mrb[0].mxu0
        %v1754 = vadd.f32 %v1314, %v1753
        %v1755 = vpop.f32.mrb[0].mxu0
        %v1756 = vadd.f32 %v1310, %v1755
        %v1757 = vpop.f32.mrb[0].mxu0
        %v1758 = vadd.f32 %v1314, %v1757
        %1759 = vmatprep.mubr.bf16.mxu0 %v1260
        %1760 = vmatmul.mubr.bf16.gmra.mrb[0].mxu0 %v1259
        %v1761 = vpop.f32.mrb[0].mxu0
        %v1762 = vadd.f32 %v1310, %v1761
        %v1763 = vpop.f32.mrb[0].mxu0
        %v1764 = vadd.f32 %v1314, %v1763
        %v1765 = vpop.f32.mrb[0].mxu0
        %v1766 = vadd.f32 %v1310, %v1765
        %v1767 = vpop.f32.mrb[0].mxu0
        %v1768 = vadd.f32 %v1314, %v1767
        %1769 = vmatprep.mubr.bf16.mxu0 %v1262
        %1770 = vmatmul.mubr.bf16.gmra.mrb[0].mxu0 %v1261
        %v1771 = vpop.f32.mrb[0].mxu0
        %v1772 = vadd.f32 %v1310, %v1771
        %v1773 = vpop.f32.mrb[0].mxu0
        %v1774 = vadd.f32 %v1314, %v1773
        %v1775 = vpop.f32.mrb[0].mxu0
        %v1776 = vadd.f32 %v1310, %v1775
        %v1777 = vpop.f32.mrb[0].mxu0
        %v1778 = vadd.f32 %v1314, %v1777
        %1779 = vmatprep.mubr.bf16.mxu0 %v1264
        %1780 = vmatmul.mubr.bf16.gmra.mrb[0].mxu0 %v1263
        %v1781 = vpop.f32.mrb[0].mxu0
        %v1782 = vadd.f32 %v1310, %v1781
        %v1783 = vpop.f32.mrb[0].mxu0
        %v1784 = vadd.f32 %v1314, %v1783
        %v1785 = vpop.f32.mrb[0].mxu0
        %v1786 = vadd.f32 %v1310, %v1785
        %v1787 = vpop.f32.mrb[0].mxu0
        %v1788 = vadd.f32 %v1314, %v1787
        %1789 = vmatprep.mubr.bf16.mxu0 %v1266
        %1790 = vmatmul.mubr.bf16.gmra.mrb[0].mxu0 %v1265
        %v1791 = vpop.f32.mrb[0].mxu0
        %v1792 = vadd.f32 %v1310, %v1791
        %v1793 = vpop.f32.mrb[0].mxu0
        %v1794 = vadd.f32 %v1314, %v1793
        %v1795 = vpop.f32.mrb[0].mxu0
        %v1796 = vadd.f32 %v1310, %v1795
        %v1797 = vpop.f32.mrb[0].mxu0
        %v1798 = vadd.f32 %v1314, %v1797
        %1799 = vmatprep.mubr.bf16.mxu0 %v1268
        %1800 = vmatmul.mubr.bf16.gmra.mrb[0].mxu0 %v1267
        %v1801 = vpop.f32.mrb[0].mxu0
        %v1802 = vadd.f32 %v1310, %v1801
        %v1803 = vpop.f32.mrb[0].mxu0
        %v1804 = vadd.f32 %v1314, %v1803
        %v1805 = vpop.f32.mrb[0].mxu0
        %v1806 = vadd.f32 %v1310, %v1805
        %v1807 = vpop.f32.mrb[0].mxu0
        %v1808 = vadd.f32 %v1314, %v1807
        %1809 = vmatprep.mubr.bf16.mxu0 %v1270
        %1810 = vmatmul.mubr.bf16.gmra.mrb[0].mxu0 %v1269
        %v1811 = vpop.f32.mrb[0].mxu0
        %v1812 = vadd.f32 %v1310, %v1811
        %v1813 = vpop.f32.mrb[0].mxu0
        %v1814 = vadd.f32 %v1314, %v1813
        %v1815 = vpop.f32.mrb[0].mxu0
        %v1816 = vadd.f32 %v1310, %v1815
        %v1817 = vpop.f32.mrb[0].mxu0
        %v1818 = vadd.f32 %v1314, %v1817
        %1819 = vmatprep.mubr.bf16.mxu0 %v1272
        %1820 = vmatmul.mubr.bf16.gmra.mrb[0].mxu0 %v1271
        %v1821 = vpop.f32.mrb[0].mxu0
        %v1822 = vadd.f32 %v1310, %v1821
        %v1823 = vpop.f32.mrb[0].mxu0
        %v1824 = vadd.f32 %v1314, %v1823
        %v1825 = vpop.f32.mrb[0].mxu0
        %v1826 = vadd.f32 %v1310, %v1825
        %v1827 = vpop.f32.mrb[0].mxu0
        %v1828 = vadd.f32 %v1314, %v1827
        %1829 = vdwg.mxu0
        %v1830 = vmax.f32 %v1512, 0.0
        %v1831 = vmax.f32 %v1514, 0.0
        %v1832 = vmax.f32 %v1516, 0.0
        %v1833 = vmax.f32 %v1518, 0.0
        %v1834 = vmax.f32 %v1522, 0.0
        %v1835 = vmax.f32 %v1524, 0.0
        %v1836 = vmax.f32 %v1526, 0.0
        %v1837 = vmax.f32 %v1528, 0.0
        %v1838 = vmax.f32 %v1532, 0.0
        %v1839 = vmax.f32 %v1534, 0.0
        %v1840 = vmax.f32 %v1536, 0.0
        %v1841 = vmax.f32 %v1538, 0.0
        %v1842 = vmax.f32 %v1542, 0.0
        %v1843 = vmax.f32 %v1544, 0.0
        %v1844 = vmax.f32 %v1546, 0.0
        %v1845 = vmax.f32 %v1548, 0.0
        %v1846 = vmax.f32 %v1552, 0.0
        %v1847 = vmax.f32 %v1554, 0.0
        %v1848 = vmax.f32 %v1556, 0.0
        %v1849 = vmax.f32 %v1558, 0.0
        %v1850 = vmax.f32 %v1562, 0.0
        %v1851 = vmax.f32 %v1564, 0.0
        %v1852 = vmax.f32 %v1566, 0.0
        %v1853 = vmax.f32 %v1568, 0.0
        %v1854 = vmax.f32 %v1572, 0.0
        %v1855 = vmax.f32 %v1574, 0.0
        %v1856 = vmax.f32 %v1576, 0.0
        %v1857 = vmax.f32 %v1578, 0.0
        %v1858 = vmax.f32 %v1582, 0.0
        %v1859 = vmax.f32 %v1584, 0.0
        %v1860 = vmax.f32 %v1586, 0.0
        %v1861 = vmax.f32 %v1588, 0.0
        %v1862 = vmax.f32 %v1592, 0.0
        %v1863 = vmax.f32 %v1594, 0.0
        %v1864 = vmax.f32 %v1596, 0.0
        %v1865 = vmax.f32 %v1598, 0.0
        %v1866 = vmax.f32 %v1602, 0.0
        %v1867 = vmax.f32 %v1604, 0.0
        %v1868 = vmax.f32 %v1606, 0.0
        %v1869 = vmax.f32 %v1608, 0.0
        %v1870 = vmax.f32 %v1612, 0.0
        %v1871 = vmax.f32 %v1614, 0.0
        %v1872 = vmax.f32 %v1616, 0.0
        %v1873 = vmax.f32 %v1618, 0.0
        %v1874 = vmax.f32 %v1622, 0.0
        %v1875 = vmax.f32 %v1624, 0.0
        %v1876 = vmax.f32 %v1626, 0.0
        %v1877 = vmax.f32 %v1628, 0.0
        %v1878 = vmax.f32 %v1632, 0.0
        %v1879 = vmax.f32 %v1634, 0.0
        %v1880 = vmax.f32 %v1636, 0.0
        %v1881 = vmax.f32 %v1638, 0.0
        %v1882 = vmax.f32 %v1642, 0.0
        %v1883 = vmax.f32 %v1644, 0.0
        %v1884 = vmax.f32 %v1646, 0.0
        %v1885 = vmax.f32 %v1648, 0.0
        %v1886 = vmax.f32 %v1652, 0.0
        %v1887 = vmax.f32 %v1654, 0.0
        %v1888 = vmax.f32 %v1656, 0.0
        %v1889 = vmax.f32 %v1658, 0.0
        %v1890 = vmax.f32 %v1662, 0.0
        %v1891 = vmax.f32 %v1664, 0.0
        %v1892 = vmax.f32 %v1666, 0.0
        %v1893 = vmax.f32 %v1668, 0.0
        %v1894 = vmax.f32 %v1672, 0.0
        %v1895 = vmax.f32 %v1674, 0.0
        %v1896 = vmax.f32 %v1676, 0.0
        %v1897 = vmax.f32 %v1678, 0.0
        %v1898 = vmax.f32 %v1682, 0.0
        %v1899 = vmax.f32 %v1684, 0.0
        %v1900 = vmax.f32 %v1686, 0.0
        %v1901 = vmax.f32 %v1688, 0.0
        %v1902 = vmax.f32 %v1692, 0.0
        %v1903 = vmax.f32 %v1694, 0.0
        %v1904 = vmax.f32 %v1696, 0.0
        %v1905 = vmax.f32 %v1698, 0.0
        %v1906 = vmax.f32 %v1702, 0.0
        %v1907 = vmax.f32 %v1704, 0.0
        %v1908 = vmax.f32 %v1706, 0.0
        %v1909 = vmax.f32 %v1708, 0.0
        %v1910 = vmax.f32 %v1712, 0.0
        %v1911 = vmax.f32 %v1714, 0.0
        %v1912 = vmax.f32 %v1716, 0.0
        %v1913 = vmax.f32 %v1718, 0.0
        %v1914 = vmax.f32 %v1722, 0.0
        %v1915 = vmax.f32 %v1724, 0.0
        %v1916 = vmax.f32 %v1726, 0.0
        %v1917 = vmax.f32 %v1728, 0.0
        %v1918 = vmax.f32 %v1732, 0.0
        %v1919 = vmax.f32 %v1734, 0.0
        %v1920 = vmax.f32 %v1736, 0.0
        %v1921 = vmax.f32 %v1738, 0.0
        %v1922 = vmax.f32 %v1742, 0.0
        %v1923 = vmax.f32 %v1744, 0.0
        %v1924 = vmax.f32 %v1746, 0.0
        %v1925 = vmax.f32 %v1748, 0.0
        %v1926 = vmax.f32 %v1752, 0.0
        %v1927 = vmax.f32 %v1754, 0.0
        %v1928 = vmax.f32 %v1756, 0.0
        %v1929 = vmax.f32 %v1758, 0.0
        %v1930 = vmax.f32 %v1762, 0.0
        %v1931 = vmax.f32 %v1764, 0.0
        %v1932 = vmax.f32 %v1766, 0.0
        %v1933 = vmax.f32 %v1768, 0.0
        %v1934 = vmax.f32 %v1772, 0.0
        %v1935 = vmax.f32 %v1774, 0.0
        %v1936 = vmax.f32 %v1776, 0.0
        %v1937 = vmax.f32 %v1778, 0.0
        %v1938 = vmax.f32 %v1782, 0.0
        %v1939 = vmax.f32 %v1784, 0.0
        %v1940 = vmax.f32 %v1786, 0.0
        %v1941 = vmax.f32 %v1788, 0.0
        %v1942 = vmax.f32 %v1792, 0.0
        %v1943 = vmax.f32 %v1794, 0.0
        %v1944 = vmax.f32 %v1796, 0.0
        %v1945 = vmax.f32 %v1798, 0.0
        %v1946 = vmax.f32 %v1802, 0.0
        %v1947 = vmax.f32 %v1804, 0.0
        %v1948 = vmax.f32 %v1806, 0.0
        %v1949 = vmax.f32 %v1808, 0.0
        %v1950 = vmax.f32 %v1812, 0.0
        %v1951 = vmax.f32 %v1814, 0.0
        %v1952 = vmax.f32 %v1816, 0.0
        %v1953 = vmax.f32 %v1818, 0.0
        %v1954 = vmax.f32 %v1822, 0.0
        %v1955 = vmax.f32 %v1824, 0.0
        %v1956 = vmax.f32 %v1826, 0.0
        %v1957 = vmax.f32 %v1828, 0.0
        %v1958 = vpack.c.bf16 %v1832, %v1830
        %v1959 = vpack.c.bf16 %v1833, %v1831
        %v1960 = vpack.c.bf16 %v1836, %v1834
        %v1961 = vpack.c.bf16 %v1837, %v1835
        %v1962 = vpack.c.bf16 %v1840, %v1838
        %v1963 = vpack.c.bf16 %v1841, %v1839
        %v1964 = vpack.c.bf16 %v1844, %v1842
        %v1965 = vpack.c.bf16 %v1845, %v1843
        %v1966 = vpack.c.bf16 %v1848, %v1846
        %v1967 = vpack.c.bf16 %v1849, %v1847
        %v1968 = vpack.c.bf16 %v1852, %v1850
        %v1969 = vpack.c.bf16 %v1853, %v1851
        %v1970 = vpack.c.bf16 %v1856, %v1854
        %v1971 = vpack.c.bf16 %v1857, %v1855
        %v1972 = vpack.c.bf16 %v1860, %v1858
        %v1973 = vpack.c.bf16 %v1861, %v1859
        %v1974 = vpack.c.bf16 %v1864, %v1862
        %v1975 = vpack.c.bf16 %v1865, %v1863
        %v1976 = vpack.c.bf16 %v1868, %v1866
        %v1977 = vpack.c.bf16 %v1869, %v1867
        %v1978 = vpack.c.bf16 %v1872, %v1870
        %v1979 = vpack.c.bf16 %v1873, %v1871
        %v1980 = vpack.c.bf16 %v1876, %v1874
        %v1981 = vpack.c.bf16 %v1877, %v1875
        %v1982 = vpack.c.bf16 %v1880, %v1878
        %v1983 = vpack.c.bf16 %v1881, %v1879
        %v1984 = vpack.c.bf16 %v1884, %v1882
        %v1985 = vpack.c.bf16 %v1885, %v1883
        %v1986 = vpack.c.bf16 %v1888, %v1886
        %v1987 = vpack.c.bf16 %v1889, %v1887
        %v1988 = vpack.c.bf16 %v1892, %v1890
        %v1989 = vpack.c.bf16 %v1893, %v1891
        %v1990 = vpack.c.bf16 %v1896, %v1894
        %v1991 = vpack.c.bf16 %v1897, %v1895
        %v1992 = vpack.c.bf16 %v1900, %v1898
        %v1993 = vpack.c.bf16 %v1901, %v1899
        %v1994 = vpack.c.bf16 %v1904, %v1902
        %v1995 = vpack.c.bf16 %v1905, %v1903
        %v1996 = vpack.c.bf16 %v1908, %v1906
        %v1997 = vpack.c.bf16 %v1909, %v1907
        %v1998 = vpack.c.bf16 %v1912, %v1910
        %v1999 = vpack.c.bf16 %v1913, %v1911
        %v2000 = vpack.c.bf16 %v1916, %v1914
        %v2001 = vpack.c.bf16 %v1917, %v1915
        %v2002 = vpack.c.bf16 %v1920, %v1918
        %v2003 = vpack.c.bf16 %v1921, %v1919
        %v2004 = vpack.c.bf16 %v1924, %v1922
        %v2005 = vpack.c.bf16 %v1925, %v1923
        %v2006 = vpack.c.bf16 %v1928, %v1926
        %v2007 = vpack.c.bf16 %v1929, %v1927
        %v2008 = vpack.c.bf16 %v1932, %v1930
        %v2009 = vpack.c.bf16 %v1933, %v1931
        %v2010 = vpack.c.bf16 %v1936, %v1934
        %v2011 = vpack.c.bf16 %v1937, %v1935
        %v2012 = vpack.c.bf16 %v1940, %v1938
        %v2013 = vpack.c.bf16 %v1941, %v1939
        %v2014 = vpack.c.bf16 %v1944, %v1942
        %v2015 = vpack.c.bf16 %v1945, %v1943
        %v2016 = vpack.c.bf16 %v1948, %v1946
        %v2017 = vpack.c.bf16 %v1949, %v1947
        %v2018 = vpack.c.bf16 %v1952, %v1950
        %v2019 = vpack.c.bf16 %v1953, %v1951
        %v2020 = vpack.c.bf16 %v1956, %v1954
        %v2021 = vpack.c.bf16 %v1957, %v1955
        %v2022 = vld [vmem:[%s5] sm:$0xf]
        %v2023 = vld [vmem:[%s5 + $0x4] sm:$0xf]
        %v2024 = vld [vmem:[%s5 + $0x8] sm:$0xf]
        %v2025 = vld [vmem:[%s5 + $0xc] sm:$0xf]
        %v2026 = vld [vmem:[%s5 + $0x10] sm:$0xf]
        %v2027 = vld [vmem:[%s5 + $0x14] sm:$0xf]
        %v2028 = vld [vmem:[%s5 + $0x18] sm:$0xf]
        %v2029 = vld [vmem:[%s5 + $0x1c] sm:$0xf]
        %v2030 = vld [vmem:[%s5 + $0x20] sm:$0xf]
        %v2031 = vld [vmem:[%s5 + $0x24] sm:$0xf]
        %v2032 = vld [vmem:[%s5 + $0x28] sm:$0xf]
        %v2033 = vld [vmem:[%s5 + $0x2c] sm:$0xf]
        %v2034 = vld [vmem:[%s5 + $0x30] sm:$0xf]
        %v2035 = vld [vmem:[%s5 + $0x34] sm:$0xf]
        %v2036 = vld [vmem:[%s5 + $0x38] sm:$0xf]
        %v2037 = vld [vmem:[%s5 + $0x3c] sm:$0xf]
        %v2038 = vld [vmem:[%s5 + $0x40] sm:$0xf]
        %v2039 = vld [vmem:[%s5 + $0x44] sm:$0xf]
        %v2040 = vld [vmem:[%s5 + $0x48] sm:$0xf]
        %v2041 = vld [vmem:[%s5 + $0x4c] sm:$0xf]
        %v2042 = vld [vmem:[%s5 + $0x50] sm:$0xf]
        %v2043 = vld [vmem:[%s5 + $0x54] sm:$0xf]
        %v2044 = vld [vmem:[%s5 + $0x58] sm:$0xf]
        %v2045 = vld [vmem:[%s5 + $0x5c] sm:$0xf]
        %v2046 = vld [vmem:[%s5 + $0x60] sm:$0xf]
        %v2047 = vld [vmem:[%s5 + $0x64] sm:$0xf]
        %v2048 = vld [vmem:[%s5 + $0x68] sm:$0xf]
        %v2049 = vld [vmem:[%s5 + $0x6c] sm:$0xf]
        %v2050 = vld [vmem:[%s5 + $0x70] sm:$0xf]
        %v2051 = vld [vmem:[%s5 + $0x74] sm:$0xf]
        %v2052 = vld [vmem:[%s5 + $0x78] sm:$0xf]
        %v2053 = vld [vmem:[%s5 + $0x7c] sm:$0xf]
        %v2054 = vld [vmem:[%s6] sm:$0x1]
        %v2056 = vlaneseq
        %v2057 = vshrl.u32 %v2056, 7
        %v2058 = vsub.s32 0, %v2057
        %v2059 = vrot.slane %v2054, %v2058
        %v2093 = vunpack.c.l.b16 %v2022
        %v2094 = vunpack.c.l.b16 %v2023
        %v2095 = vunpack.c.l.b16 %v2024
        %v2096 = vunpack.c.l.b16 %v2025
        %v2097 = vunpack.c.l.b16 %v2026
        %v2098 = vunpack.c.l.b16 %v2027
        %v2099 = vunpack.c.l.b16 %v2028
        %v2100 = vunpack.c.l.b16 %v2029
        %v2101 = vunpack.c.l.b16 %v2030
        %v2102 = vunpack.c.l.b16 %v2031
        %v2103 = vunpack.c.l.b16 %v2032
        %v2104 = vunpack.c.l.b16 %v2033
        %v2105 = vunpack.c.l.b16 %v2034
        %v2106 = vunpack.c.l.b16 %v2035
        %v2107 = vunpack.c.l.b16 %v2036
        %v2108 = vunpack.c.l.b16 %v2037
        %v2109 = vunpack.c.l.b16 %v2038
        %v2110 = vunpack.c.l.b16 %v2039
        %v2111 = vunpack.c.l.b16 %v2040
        %v2112 = vunpack.c.l.b16 %v2041
        %v2113 = vunpack.c.l.b16 %v2042
        %v2114 = vunpack.c.l.b16 %v2043
        %v2115 = vunpack.c.l.b16 %v2044
        %v2116 = vunpack.c.l.b16 %v2045
        %v2117 = vunpack.c.l.b16 %v2046
        %v2118 = vunpack.c.l.b16 %v2047
        %v2119 = vunpack.c.l.b16 %v2048
        %v2120 = vunpack.c.l.b16 %v2049
        %v2121 = vunpack.c.l.b16 %v2050
        %v2122 = vunpack.c.l.b16 %v2051
        %v2123 = vunpack.c.l.b16 %v2052
        %v2124 = vunpack.c.l.b16 %v2053
        %v2125 = vpack.c.b16 %v2094, %v2093
        %v2126 = vpack.c.b16 %v2096, %v2095
        %v2127 = vpack.c.b16 %v2098, %v2097
        %v2128 = vpack.c.b16 %v2100, %v2099
        %v2129 = vpack.c.b16 %v2102, %v2101
        %v2130 = vpack.c.b16 %v2104, %v2103
        %v2131 = vpack.c.b16 %v2106, %v2105
        %v2132 = vpack.c.b16 %v2108, %v2107
        %v2133 = vpack.c.b16 %v2110, %v2109
        %v2134 = vpack.c.b16 %v2112, %v2111
        %v2135 = vpack.c.b16 %v2114, %v2113
        %v2136 = vpack.c.b16 %v2116, %v2115
        %v2137 = vpack.c.b16 %v2118, %v2117
        %v2138 = vpack.c.b16 %v2120, %v2119
        %v2139 = vpack.c.b16 %v2122, %v2121
        %v2140 = vpack.c.b16 %v2124, %v2123
        %2157 = vmatprep.subr.bf16.mxu0 0
        %2158 = vmatpush1.bf16.msra.mxu0 %v2125
        %2159 = vmatprep.subr.bf16.mxu0 0
        %2160 = vmatpush1.bf16.msra.mxu0 %v2126
        %2161 = vmatprep.subr.bf16.mxu0 0
        %2162 = vmatpush1.bf16.msra.mxu0 %v2127
        %2163 = vmatprep.subr.bf16.mxu0 0
        %2164 = vmatpush1.bf16.msra.mxu0 %v2128
        %2165 = vmatprep.subr.bf16.mxu0 0
        %2166 = vmatpush1.bf16.msra.mxu0 %v2129
        %2167 = vmatprep.subr.bf16.mxu0 0
        %2168 = vmatpush1.bf16.msra.mxu0 %v2130
        %2169 = vmatprep.subr.bf16.mxu0 0
        %2170 = vmatpush1.bf16.msra.mxu0 %v2131
        %2171 = vmatprep.subr.bf16.mxu0 0
        %2172 = vmatpush1.bf16.msra.mxu0 %v2132
        %2173 = vmatprep.subr.bf16.mxu0 0
        %2174 = vmatpush1.bf16.msra.mxu0 %v2133
        %2175 = vmatprep.subr.bf16.mxu0 0
        %2176 = vmatpush1.bf16.msra.mxu0 %v2134
        %2177 = vmatprep.subr.bf16.mxu0 0
        %2178 = vmatpush1.bf16.msra.mxu0 %v2135
        %2179 = vmatprep.subr.bf16.mxu0 0
        %2180 = vmatpush1.bf16.msra.mxu0 %v2136
        %2181 = vmatprep.subr.bf16.mxu0 0
        %2182 = vmatpush1.bf16.msra.mxu0 %v2137
        %2183 = vmatprep.subr.bf16.mxu0 0
        %2184 = vmatpush1.bf16.msra.mxu0 %v2138
        %2185 = vmatprep.subr.bf16.mxu0 0
        %2186 = vmatpush1.bf16.msra.mxu0 %v2139
        %2187 = vmatprep.subr.bf16.mxu0 0
        %2188 = vmatpush1.bf16.msra.mxu0 %v2140
        %2189 = vmatprep.mubr.bf16.mxu0 %v1959
        %2190 = vmatmul.mubr.bf16.gmra.mrb[0].mxu0 %v1958
        %v2191 = vpop.f32.mrb[0].mxu0
        %v2192 = vadd.f32 %v2059, %v2191
        %v2193 = vpop.f32.mrb[0].mxu0
        %v2194 = vpop.f32.mrb[0].mxu0
        %v2195 = vadd.f32 %v2059, %v2194
        %v2196 = vpop.f32.mrb[0].mxu0
        %2197 = vmatprep.mubr.bf16.mxu0 %v1961
        %2198 = vmatmul.mubr.bf16.gmra.mrb[0].mxu0 %v1960
        %v2199 = vpop.f32.mrb[0].mxu0
        %v2200 = vadd.f32 %v2059, %v2199
        %v2201 = vpop.f32.mrb[0].mxu0
        %v2202 = vpop.f32.mrb[0].mxu0
        %v2203 = vadd.f32 %v2059, %v2202
        %v2204 = vpop.f32.mrb[0].mxu0
        %2205 = vmatprep.mubr.bf16.mxu0 %v1963
        %2206 = vmatmul.mubr.bf16.gmra.mrb[0].mxu0 %v1962
        %v2207 = vpop.f32.mrb[0].mxu0
        %v2208 = vadd.f32 %v2059, %v2207
        %v2209 = vpop.f32.mrb[0].mxu0
        %v2210 = vpop.f32.mrb[0].mxu0
        %v2211 = vadd.f32 %v2059, %v2210
        %v2212 = vpop.f32.mrb[0].mxu0
        %2213 = vmatprep.mubr.bf16.mxu0 %v1965
        %2214 = vmatmul.mubr.bf16.gmra.mrb[0].mxu0 %v1964
        %v2215 = vpop.f32.mrb[0].mxu0
        %v2216 = vadd.f32 %v2059, %v2215
        %v2217 = vpop.f32.mrb[0].mxu0
        %v2218 = vpop.f32.mrb[0].mxu0
        %v2219 = vadd.f32 %v2059, %v2218
        %v2220 = vpop.f32.mrb[0].mxu0
        %2221 = vmatprep.mubr.bf16.mxu0 %v1967
        %2222 = vmatmul.mubr.bf16.gmra.mrb[0].mxu0 %v1966
        %v2223 = vpop.f32.mrb[0].mxu0
        %v2224 = vadd.f32 %v2059, %v2223
        %v2225 = vpop.f32.mrb[0].mxu0
        %v2226 = vpop.f32.mrb[0].mxu0
        %v2227 = vadd.f32 %v2059, %v2226
        %v2228 = vpop.f32.mrb[0].mxu0
        %2229 = vmatprep.mubr.bf16.mxu0 %v1969
        %2230 = vmatmul.mubr.bf16.gmra.mrb[0].mxu0 %v1968
        %v2231 = vpop.f32.mrb[0].mxu0
        %v2232 = vadd.f32 %v2059, %v2231
        %v2233 = vpop.f32.mrb[0].mxu0
        %v2234 = vpop.f32.mrb[0].mxu0
        %v2235 = vadd.f32 %v2059, %v2234
        %v2236 = vpop.f32.mrb[0].mxu0
        %2237 = vmatprep.mubr.bf16.mxu0 %v1971
        %2238 = vmatmul.mubr.bf16.gmra.mrb[0].mxu0 %v1970
        %v2239 = vpop.f32.mrb[0].mxu0
        %v2240 = vadd.f32 %v2059, %v2239
        %v2241 = vpop.f32.mrb[0].mxu0
        %v2242 = vpop.f32.mrb[0].mxu0
        %v2243 = vadd.f32 %v2059, %v2242
        %v2244 = vpop.f32.mrb[0].mxu0
        %2245 = vmatprep.mubr.bf16.mxu0 %v1973
        %2246 = vmatmul.mubr.bf16.gmra.mrb[0].mxu0 %v1972
        %v2247 = vpop.f32.mrb[0].mxu0
        %v2248 = vadd.f32 %v2059, %v2247
        %v2249 = vpop.f32.mrb[0].mxu0
        %v2250 = vpop.f32.mrb[0].mxu0
        %v2251 = vadd.f32 %v2059, %v2250
        %v2252 = vpop.f32.mrb[0].mxu0
        %2253 = vmatprep.mubr.bf16.mxu0 %v1975
        %2254 = vmatmul.mubr.bf16.gmra.mrb[0].mxu0 %v1974
        %v2255 = vpop.f32.mrb[0].mxu0
        %v2256 = vadd.f32 %v2059, %v2255
        %v2257 = vpop.f32.mrb[0].mxu0
        %v2258 = vpop.f32.mrb[0].mxu0
        %v2259 = vadd.f32 %v2059, %v2258
        %v2260 = vpop.f32.mrb[0].mxu0
        %2261 = vmatprep.mubr.bf16.mxu0 %v1977
        %2262 = vmatmul.mubr.bf16.gmra.mrb[0].mxu0 %v1976
        %v2263 = vpop.f32.mrb[0].mxu0
        %v2264 = vadd.f32 %v2059, %v2263
        %v2265 = vpop.f32.mrb[0].mxu0
        %v2266 = vpop.f32.mrb[0].mxu0
        %v2267 = vadd.f32 %v2059, %v2266
        %v2268 = vpop.f32.mrb[0].mxu0
        %2269 = vmatprep.mubr.bf16.mxu0 %v1979
        %2270 = vmatmul.mubr.bf16.gmra.mrb[0].mxu0 %v1978
        %v2271 = vpop.f32.mrb[0].mxu0
        %v2272 = vadd.f32 %v2059, %v2271
        %v2273 = vpop.f32.mrb[0].mxu0
        %v2274 = vpop.f32.mrb[0].mxu0
        %v2275 = vadd.f32 %v2059, %v2274
        %v2276 = vpop.f32.mrb[0].mxu0
        %2277 = vmatprep.mubr.bf16.mxu0 %v1981
        %2278 = vmatmul.mubr.bf16.gmra.mrb[0].mxu0 %v1980
        %v2279 = vpop.f32.mrb[0].mxu0
        %v2280 = vadd.f32 %v2059, %v2279
        %v2281 = vpop.f32.mrb[0].mxu0
        %v2282 = vpop.f32.mrb[0].mxu0
        %v2283 = vadd.f32 %v2059, %v2282
        %v2284 = vpop.f32.mrb[0].mxu0
        %2285 = vmatprep.mubr.bf16.mxu0 %v1983
        %2286 = vmatmul.mubr.bf16.gmra.mrb[0].mxu0 %v1982
        %v2287 = vpop.f32.mrb[0].mxu0
        %v2288 = vadd.f32 %v2059, %v2287
        %v2289 = vpop.f32.mrb[0].mxu0
        %v2290 = vpop.f32.mrb[0].mxu0
        %v2291 = vadd.f32 %v2059, %v2290
        %v2292 = vpop.f32.mrb[0].mxu0
        %2293 = vmatprep.mubr.bf16.mxu0 %v1985
        %2294 = vmatmul.mubr.bf16.gmra.mrb[0].mxu0 %v1984
        %v2295 = vpop.f32.mrb[0].mxu0
        %v2296 = vadd.f32 %v2059, %v2295
        %v2297 = vpop.f32.mrb[0].mxu0
        %v2298 = vpop.f32.mrb[0].mxu0
        %v2299 = vadd.f32 %v2059, %v2298
        %v2300 = vpop.f32.mrb[0].mxu0
        %2301 = vmatprep.mubr.bf16.mxu0 %v1987
        %2302 = vmatmul.mubr.bf16.gmra.mrb[0].mxu0 %v1986
        %v2303 = vpop.f32.mrb[0].mxu0
        %v2304 = vadd.f32 %v2059, %v2303
        %v2305 = vpop.f32.mrb[0].mxu0
        %v2306 = vpop.f32.mrb[0].mxu0
        %v2307 = vadd.f32 %v2059, %v2306
        %v2308 = vpop.f32.mrb[0].mxu0
        %2309 = vmatprep.mubr.bf16.mxu0 %v1989
        %2310 = vmatmul.mubr.bf16.gmra.mrb[0].mxu0 %v1988
        %v2311 = vpop.f32.mrb[0].mxu0
        %v2312 = vadd.f32 %v2059, %v2311
        %v2313 = vpop.f32.mrb[0].mxu0
        %v2314 = vpop.f32.mrb[0].mxu0
        %v2315 = vadd.f32 %v2059, %v2314
        %v2316 = vpop.f32.mrb[0].mxu0
        %2317 = vmatprep.mubr.bf16.mxu0 %v1991
        %2318 = vmatmul.mubr.bf16.gmra.mrb[0].mxu0 %v1990
        %v2319 = vpop.f32.mrb[0].mxu0
        %v2320 = vadd.f32 %v2059, %v2319
        %v2321 = vpop.f32.mrb[0].mxu0
        %v2322 = vpop.f32.mrb[0].mxu0
        %v2323 = vadd.f32 %v2059, %v2322
        %v2324 = vpop.f32.mrb[0].mxu0
        %2325 = vmatprep.mubr.bf16.mxu0 %v1993
        %2326 = vmatmul.mubr.bf16.gmra.mrb[0].mxu0 %v1992
        %v2327 = vpop.f32.mrb[0].mxu0
        %v2328 = vadd.f32 %v2059, %v2327
        %v2329 = vpop.f32.mrb[0].mxu0
        %v2330 = vpop.f32.mrb[0].mxu0
        %v2331 = vadd.f32 %v2059, %v2330
        %v2332 = vpop.f32.mrb[0].mxu0
        %2333 = vmatprep.mubr.bf16.mxu0 %v1995
        %2334 = vmatmul.mubr.bf16.gmra.mrb[0].mxu0 %v1994
        %v2335 = vpop.f32.mrb[0].mxu0
        %v2336 = vadd.f32 %v2059, %v2335
        %v2337 = vpop.f32.mrb[0].mxu0
        %v2338 = vpop.f32.mrb[0].mxu0
        %v2339 = vadd.f32 %v2059, %v2338
        %v2340 = vpop.f32.mrb[0].mxu0
        %2341 = vmatprep.mubr.bf16.mxu0 %v1997
        %2342 = vmatmul.mubr.bf16.gmra.mrb[0].mxu0 %v1996
        %v2343 = vpop.f32.mrb[0].mxu0
        %v2344 = vadd.f32 %v2059, %v2343
        %v2345 = vpop.f32.mrb[0].mxu0
        %v2346 = vpop.f32.mrb[0].mxu0
        %v2347 = vadd.f32 %v2059, %v2346
        %v2348 = vpop.f32.mrb[0].mxu0
        %2349 = vmatprep.mubr.bf16.mxu0 %v1999
        %2350 = vmatmul.mubr.bf16.gmra.mrb[0].mxu0 %v1998
        %v2351 = vpop.f32.mrb[0].mxu0
        %v2352 = vadd.f32 %v2059, %v2351
        %v2353 = vpop.f32.mrb[0].mxu0
        %v2354 = vpop.f32.mrb[0].mxu0
        %v2355 = vadd.f32 %v2059, %v2354
        %v2356 = vpop.f32.mrb[0].mxu0
        %2357 = vmatprep.mubr.bf16.mxu0 %v2001
        %2358 = vmatmul.mubr.bf16.gmra.mrb[0].mxu0 %v2000
        %v2359 = vpop.f32.mrb[0].mxu0
        %v2360 = vadd.f32 %v2059, %v2359
        %v2361 = vpop.f32.mrb[0].mxu0
        %v2362 = vpop.f32.mrb[0].mxu0
        %v2363 = vadd.f32 %v2059, %v2362
        %v2364 = vpop.f32.mrb[0].mxu0
        %2365 = vmatprep.mubr.bf16.mxu0 %v2003
        %2366 = vmatmul.mubr.bf16.gmra.mrb[0].mxu0 %v2002
        %v2367 = vpop.f32.mrb[0].mxu0
        %v2368 = vadd.f32 %v2059, %v2367
        %v2369 = vpop.f32.mrb[0].mxu0
        %v2370 = vpop.f32.mrb[0].mxu0
        %v2371 = vadd.f32 %v2059, %v2370
        %v2372 = vpop.f32.mrb[0].mxu0
        %2373 = vmatprep.mubr.bf16.mxu0 %v2005
        %2374 = vmatmul.mubr.bf16.gmra.mrb[0].mxu0 %v2004
        %v2375 = vpop.f32.mrb[0].mxu0
        %v2376 = vadd.f32 %v2059, %v2375
        %v2377 = vpop.f32.mrb[0].mxu0
        %v2378 = vpop.f32.mrb[0].mxu0
        %v2379 = vadd.f32 %v2059, %v2378
        %v2380 = vpop.f32.mrb[0].mxu0
        %2381 = vmatprep.mubr.bf16.mxu0 %v2007
        %2382 = vmatmul.mubr.bf16.gmra.mrb[0].mxu0 %v2006
        %v2383 = vpop.f32.mrb[0].mxu0
        %v2384 = vadd.f32 %v2059, %v2383
        %v2385 = vpop.f32.mrb[0].mxu0
        %v2386 = vpop.f32.mrb[0].mxu0
        %v2387 = vadd.f32 %v2059, %v2386
        %v2388 = vpop.f32.mrb[0].mxu0
        %2389 = vmatprep.mubr.bf16.mxu0 %v2009
        %2390 = vmatmul.mubr.bf16.gmra.mrb[0].mxu0 %v2008
        %v2391 = vpop.f32.mrb[0].mxu0
        %v2392 = vadd.f32 %v2059, %v2391
        %v2393 = vpop.f32.mrb[0].mxu0
        %v2394 = vpop.f32.mrb[0].mxu0
        %v2395 = vadd.f32 %v2059, %v2394
        %v2396 = vpop.f32.mrb[0].mxu0
        %2397 = vmatprep.mubr.bf16.mxu0 %v2011
        %2398 = vmatmul.mubr.bf16.gmra.mrb[0].mxu0 %v2010
        %v2399 = vpop.f32.mrb[0].mxu0
        %v2400 = vadd.f32 %v2059, %v2399
        %v2401 = vpop.f32.mrb[0].mxu0
        %v2402 = vpop.f32.mrb[0].mxu0
        %v2403 = vadd.f32 %v2059, %v2402
        %v2404 = vpop.f32.mrb[0].mxu0
        %2405 = vmatprep.mubr.bf16.mxu0 %v2013
        %2406 = vmatmul.mubr.bf16.gmra.mrb[0].mxu0 %v2012
        %v2407 = vpop.f32.mrb[0].mxu0
        %v2408 = vadd.f32 %v2059, %v2407
        %v2409 = vpop.f32.mrb[0].mxu0
        %v2410 = vpop.f32.mrb[0].mxu0
        %v2411 = vadd.f32 %v2059, %v2410
        %v2412 = vpop.f32.mrb[0].mxu0
        %2413 = vmatprep.mubr.bf16.mxu0 %v2015
        %2414 = vmatmul.mubr.bf16.gmra.mrb[0].mxu0 %v2014
        %v2415 = vpop.f32.mrb[0].mxu0
        %v2416 = vadd.f32 %v2059, %v2415
        %v2417 = vpop.f32.mrb[0].mxu0
        %v2418 = vpop.f32.mrb[0].mxu0
        %v2419 = vadd.f32 %v2059, %v2418
        %v2420 = vpop.f32.mrb[0].mxu0
        %2421 = vmatprep.mubr.bf16.mxu0 %v2017
        %2422 = vmatmul.mubr.bf16.gmra.mrb[0].mxu0 %v2016
        %v2423 = vpop.f32.mrb[0].mxu0
        %v2424 = vadd.f32 %v2059, %v2423
        %v2425 = vpop.f32.mrb[0].mxu0
        %v2426 = vpop.f32.mrb[0].mxu0
        %v2427 = vadd.f32 %v2059, %v2426
        %v2428 = vpop.f32.mrb[0].mxu0
        %2429 = vmatprep.mubr.bf16.mxu0 %v2019
        %2430 = vmatmul.mubr.bf16.gmra.mrb[0].mxu0 %v2018
        %v2431 = vpop.f32.mrb[0].mxu0
        %v2432 = vadd.f32 %v2059, %v2431
        %v2433 = vpop.f32.mrb[0].mxu0
        %v2434 = vpop.f32.mrb[0].mxu0
        %v2435 = vadd.f32 %v2059, %v2434
        %v2436 = vpop.f32.mrb[0].mxu0
        %2437 = vmatprep.mubr.bf16.mxu0 %v2021
        %2438 = vmatmul.mubr.bf16.gmra.mrb[0].mxu0 %v2020
        %v2439 = vpop.f32.mrb[0].mxu0
        %v2440 = vadd.f32 %v2059, %v2439
        %v2441 = vpop.f32.mrb[0].mxu0
        %v2442 = vpop.f32.mrb[0].mxu0
        %v2443 = vadd.f32 %v2059, %v2442
        %v2444 = vpop.f32.mrb[0].mxu0
        %2445 = vdwg.mxu0
        %v2446 = vxor.u32 %v2192, 2147483648
        %v2447 = vxor.u32 %v2195, 2147483648
        %v2448 = vxor.u32 %v2200, 2147483648
        %v2449 = vxor.u32 %v2203, 2147483648
        %v2450 = vxor.u32 %v2208, 2147483648
        %v2451 = vxor.u32 %v2211, 2147483648
        %v2452 = vxor.u32 %v2216, 2147483648
        %v2453 = vxor.u32 %v2219, 2147483648
        %v2454 = vxor.u32 %v2224, 2147483648
        %v2455 = vxor.u32 %v2227, 2147483648
        %v2456 = vxor.u32 %v2232, 2147483648
        %v2457 = vxor.u32 %v2235, 2147483648
        %v2458 = vxor.u32 %v2240, 2147483648
        %v2459 = vxor.u32 %v2243, 2147483648
        %v2460 = vxor.u32 %v2248, 2147483648
        %v2461 = vxor.u32 %v2251, 2147483648
        %v2462 = vxor.u32 %v2256, 2147483648
        %v2463 = vxor.u32 %v2259, 2147483648
        %v2464 = vxor.u32 %v2264, 2147483648
        %v2465 = vxor.u32 %v2267, 2147483648
        %v2466 = vxor.u32 %v2272, 2147483648
        %v2467 = vxor.u32 %v2275, 2147483648
        %v2468 = vxor.u32 %v2280, 2147483648
        %v2469 = vxor.u32 %v2283, 2147483648
        %v2470 = vxor.u32 %v2288, 2147483648
        %v2471 = vxor.u32 %v2291, 2147483648
        %v2472 = vxor.u32 %v2296, 2147483648
        %v2473 = vxor.u32 %v2299, 2147483648
        %v2474 = vxor.u32 %v2304, 2147483648
        %v2475 = vxor.u32 %v2307, 2147483648
        %v2476 = vxor.u32 %v2312, 2147483648
        %v2477 = vxor.u32 %v2315, 2147483648
        %v2478 = vxor.u32 %v2320, 2147483648
        %v2479 = vxor.u32 %v2323, 2147483648
        %v2480 = vxor.u32 %v2328, 2147483648
        %v2481 = vxor.u32 %v2331, 2147483648
        %v2482 = vxor.u32 %v2336, 2147483648
        %v2483 = vxor.u32 %v2339, 2147483648
        %v2484 = vxor.u32 %v2344, 2147483648
        %v2485 = vxor.u32 %v2347, 2147483648
        %v2486 = vxor.u32 %v2352, 2147483648
        %v2487 = vxor.u32 %v2355, 2147483648
        %v2488 = vxor.u32 %v2360, 2147483648
        %v2489 = vxor.u32 %v2363, 2147483648
        %v2490 = vxor.u32 %v2368, 2147483648
        %v2491 = vxor.u32 %v2371, 2147483648
        %v2492 = vxor.u32 %v2376, 2147483648
        %v2493 = vxor.u32 %v2379, 2147483648
        %v2494 = vxor.u32 %v2384, 2147483648
        %v2495 = vxor.u32 %v2387, 2147483648
        %v2496 = vxor.u32 %v2392, 2147483648
        %v2497 = vxor.u32 %v2395, 2147483648
        %v2498 = vxor.u32 %v2400, 2147483648
        %v2499 = vxor.u32 %v2403, 2147483648
        %v2500 = vxor.u32 %v2408, 2147483648
        %v2501 = vxor.u32 %v2411, 2147483648
        %v2502 = vxor.u32 %v2416, 2147483648
        %v2503 = vxor.u32 %v2419, 2147483648
        %v2504 = vxor.u32 %v2424, 2147483648
        %v2505 = vxor.u32 %v2427, 2147483648
        %v2506 = vxor.u32 %v2432, 2147483648
        %v2507 = vxor.u32 %v2435, 2147483648
        %v2508 = vxor.u32 %v2440, 2147483648
        %v2509 = vxor.u32 %v2443, 2147483648
        %v2510 = vmul.f32 %v2446, 1.442695
        %v2511 = vpow.pop %v2510
        %v2512 = vmul.f32 %v2447, 1.442695
        %v2513 = vpow.pop %v2512
        %v2514 = vmul.f32 %v2448, 1.442695
        %v2515 = vpow.pop %v2514
        %v2516 = vmul.f32 %v2449, 1.442695
        %v2517 = vpow.pop %v2516
        %v2518 = vmul.f32 %v2450, 1.442695
        %v2519 = vpow.pop %v2518
        %v2520 = vmul.f32 %v2451, 1.442695
        %v2521 = vpow.pop %v2520
        %v2522 = vmul.f32 %v2452, 1.442695
        %v2523 = vpow.pop %v2522
        %v2524 = vmul.f32 %v2453, 1.442695
        %v2525 = vpow.pop %v2524
        %v2526 = vmul.f32 %v2454, 1.442695
        %v2527 = vpow.pop %v2526
        %v2528 = vmul.f32 %v2455, 1.442695
        %v2529 = vpow.pop %v2528
        %v2530 = vmul.f32 %v2456, 1.442695
        %v2531 = vpow.pop %v2530
        %v2532 = vmul.f32 %v2457, 1.442695
        %v2533 = vpow.pop %v2532
        %v2534 = vmul.f32 %v2458, 1.442695
        %v2535 = vpow.pop %v2534
        %v2536 = vmul.f32 %v2459, 1.442695
        %v2537 = vpow.pop %v2536
        %v2538 = vmul.f32 %v2460, 1.442695
        %v2539 = vpow.pop %v2538
        %v2540 = vmul.f32 %v2461, 1.442695
        %v2541 = vpow.pop %v2540
        %v2542 = vmul.f32 %v2462, 1.442695
        %v2543 = vpow.pop %v2542
        %v2544 = vmul.f32 %v2463, 1.442695
        %v2545 = vpow.pop %v2544
        %v2546 = vmul.f32 %v2464, 1.442695
        %v2547 = vpow.pop %v2546
        %v2548 = vmul.f32 %v2465, 1.442695
        %v2549 = vpow.pop %v2548
        %v2550 = vmul.f32 %v2466, 1.442695
        %v2551 = vpow.pop %v2550
        %v2552 = vmul.f32 %v2467, 1.442695
        %v2553 = vpow.pop %v2552
        %v2554 = vmul.f32 %v2468, 1.442695
        %v2555 = vpow.pop %v2554
        %v2556 = vmul.f32 %v2469, 1.442695
        %v2557 = vpow.pop %v2556
        %v2558 = vmul.f32 %v2470, 1.442695
        %v2559 = vpow.pop %v2558
        %v2560 = vmul.f32 %v2471, 1.442695
        %v2561 = vpow.pop %v2560
        %v2562 = vmul.f32 %v2472, 1.442695
        %v2563 = vpow.pop %v2562
        %v2564 = vmul.f32 %v2473, 1.442695
        %v2565 = vpow.pop %v2564
        %v2566 = vmul.f32 %v2474, 1.442695
        %v2567 = vpow.pop %v2566
        %v2568 = vmul.f32 %v2475, 1.442695
        %v2569 = vpow.pop %v2568
        %v2570 = vmul.f32 %v2476, 1.442695
        %v2571 = vpow.pop %v2570
        %v2572 = vmul.f32 %v2477, 1.442695
        %v2573 = vpow.pop %v2572
        %v2574 = vmul.f32 %v2478, 1.442695
        %v2575 = vpow.pop %v2574
        %v2576 = vmul.f32 %v2479, 1.442695
        %v2577 = vpow.pop %v2576
        %v2578 = vmul.f32 %v2480, 1.442695
        %v2579 = vpow.pop %v2578
        %v2580 = vmul.f32 %v2481, 1.442695
        %v2581 = vpow.pop %v2580
        %v2582 = vmul.f32 %v2482, 1.442695
        %v2583 = vpow.pop %v2582
        %v2584 = vmul.f32 %v2483, 1.442695
        %v2585 = vpow.pop %v2584
        %v2586 = vmul.f32 %v2484, 1.442695
        %v2587 = vpow.pop %v2586
        %v2588 = vmul.f32 %v2485, 1.442695
        %v2589 = vpow.pop %v2588
        %v2590 = vmul.f32 %v2486, 1.442695
        %v2591 = vpow.pop %v2590
        %v2592 = vmul.f32 %v2487, 1.442695
        %v2593 = vpow.pop %v2592
        %v2594 = vmul.f32 %v2488, 1.442695
        %v2595 = vpow.pop %v2594
        %v2596 = vmul.f32 %v2489, 1.442695
        %v2597 = vpow.pop %v2596
        %v2598 = vmul.f32 %v2490, 1.442695
        %v2599 = vpow.pop %v2598
        %v2600 = vmul.f32 %v2491, 1.442695
        %v2601 = vpow.pop %v2600
        %v2602 = vmul.f32 %v2492, 1.442695
        %v2603 = vpow.pop %v2602
        %v2604 = vmul.f32 %v2493, 1.442695
        %v2605 = vpow.pop %v2604
        %v2606 = vmul.f32 %v2494, 1.442695
        %v2607 = vpow.pop %v2606
        %v2608 = vmul.f32 %v2495, 1.442695
        %v2609 = vpow.pop %v2608
        %v2610 = vmul.f32 %v2496, 1.442695
        %v2611 = vpow.pop %v2610
        %v2612 = vmul.f32 %v2497, 1.442695
        %v2613 = vpow.pop %v2612
        %v2614 = vmul.f32 %v2498, 1.442695
        %v2615 = vpow.pop %v2614
        %v2616 = vmul.f32 %v2499, 1.442695
        %v2617 = vpow.pop %v2616
        %v2618 = vmul.f32 %v2500, 1.442695
        %v2619 = vpow.pop %v2618
        %v2620 = vmul.f32 %v2501, 1.442695
        %v2621 = vpow.pop %v2620
        %v2622 = vmul.f32 %v2502, 1.442695
        %v2623 = vpow.pop %v2622
        %v2624 = vmul.f32 %v2503, 1.442695
        %v2625 = vpow.pop %v2624
        %v2626 = vmul.f32 %v2504, 1.442695
        %v2627 = vpow.pop %v2626
        %v2628 = vmul.f32 %v2505, 1.442695
        %v2629 = vpow.pop %v2628
        %v2630 = vmul.f32 %v2506, 1.442695
        %v2631 = vpow.pop %v2630
        %v2632 = vmul.f32 %v2507, 1.442695
        %v2633 = vpow.pop %v2632
        %v2634 = vmul.f32 %v2508, 1.442695
        %v2635 = vpow.pop %v2634
        %v2636 = vmul.f32 %v2509, 1.442695
        %v2637 = vpow.pop %v2636
        %v2638 = vadd.f32 %v2511, 1.0
        %v2639 = vadd.f32 %v2513, 1.0
        %v2640 = vadd.f32 %v2515, 1.0
        %v2641 = vadd.f32 %v2517, 1.0
        %v2642 = vadd.f32 %v2519, 1.0
        %v2643 = vadd.f32 %v2521, 1.0
        %v2644 = vadd.f32 %v2523, 1.0
        %v2645 = vadd.f32 %v2525, 1.0
        %v2646 = vadd.f32 %v2527, 1.0
        %v2647 = vadd.f32 %v2529, 1.0
        %v2648 = vadd.f32 %v2531, 1.0
        %v2649 = vadd.f32 %v2533, 1.0
        %v2650 = vadd.f32 %v2535, 1.0
        %v2651 = vadd.f32 %v2537, 1.0
        %v2652 = vadd.f32 %v2539, 1.0
        %v2653 = vadd.f32 %v2541, 1.0
        %v2654 = vadd.f32 %v2543, 1.0
        %v2655 = vadd.f32 %v2545, 1.0
        %v2656 = vadd.f32 %v2547, 1.0
        %v2657 = vadd.f32 %v2549, 1.0
        %v2658 = vadd.f32 %v2551, 1.0
        %v2659 = vadd.f32 %v2553, 1.0
        %v2660 = vadd.f32 %v2555, 1.0
        %v2661 = vadd.f32 %v2557, 1.0
        %v2662 = vadd.f32 %v2559, 1.0
        %v2663 = vadd.f32 %v2561, 1.0
        %v2664 = vadd.f32 %v2563, 1.0
        %v2665 = vadd.f32 %v2565, 1.0
        %v2666 = vadd.f32 %v2567, 1.0
        %v2667 = vadd.f32 %v2569, 1.0
        %v2668 = vadd.f32 %v2571, 1.0
        %v2669 = vadd.f32 %v2573, 1.0
        %v2670 = vadd.f32 %v2575, 1.0
        %v2671 = vadd.f32 %v2577, 1.0
        %v2672 = vadd.f32 %v2579, 1.0
        %v2673 = vadd.f32 %v2581, 1.0
        %v2674 = vadd.f32 %v2583, 1.0
        %v2675 = vadd.f32 %v2585, 1.0
        %v2676 = vadd.f32 %v2587, 1.0
        %v2677 = vadd.f32 %v2589, 1.0
        %v2678 = vadd.f32 %v2591, 1.0
        %v2679 = vadd.f32 %v2593, 1.0
        %v2680 = vadd.f32 %v2595, 1.0
        %v2681 = vadd.f32 %v2597, 1.0
        %v2682 = vadd.f32 %v2599, 1.0
        %v2683 = vadd.f32 %v2601, 1.0
        %v2684 = vadd.f32 %v2603, 1.0
        %v2685 = vadd.f32 %v2605, 1.0
        %v2686 = vadd.f32 %v2607, 1.0
        %v2687 = vadd.f32 %v2609, 1.0
        %v2688 = vadd.f32 %v2611, 1.0
        %v2689 = vadd.f32 %v2613, 1.0
        %v2690 = vadd.f32 %v2615, 1.0
        %v2691 = vadd.f32 %v2617, 1.0
        %v2692 = vadd.f32 %v2619, 1.0
        %v2693 = vadd.f32 %v2621, 1.0
        %v2694 = vadd.f32 %v2623, 1.0
        %v2695 = vadd.f32 %v2625, 1.0
        %v2696 = vadd.f32 %v2627, 1.0
        %v2697 = vadd.f32 %v2629, 1.0
        %v2698 = vadd.f32 %v2631, 1.0
        %v2699 = vadd.f32 %v2633, 1.0
        %v2700 = vadd.f32 %v2635, 1.0
        %v2701 = vadd.f32 %v2637, 1.0
        %v2702 = vrcp.pop %v2638
        %v2703 = vmul.f32 1.0, %v2702
        %v2704 = vrcp.pop %v2639
        %v2705 = vmul.f32 1.0, %v2704
        %v2706 = vrcp.pop %v2640
        %v2707 = vmul.f32 1.0, %v2706
        %v2708 = vrcp.pop %v2641
        %v2709 = vmul.f32 1.0, %v2708
        %v2710 = vrcp.pop %v2642
        %v2711 = vmul.f32 1.0, %v2710
        %v2712 = vrcp.pop %v2643
        %v2713 = vmul.f32 1.0, %v2712
        %v2714 = vrcp.pop %v2644
        %v2715 = vmul.f32 1.0, %v2714
        %v2716 = vrcp.pop %v2645
        %v2717 = vmul.f32 1.0, %v2716
        %v2718 = vrcp.pop %v2646
        %v2719 = vmul.f32 1.0, %v2718
        %v2720 = vrcp.pop %v2647
        %v2721 = vmul.f32 1.0, %v2720
        %v2722 = vrcp.pop %v2648
        %v2723 = vmul.f32 1.0, %v2722
        %v2724 = vrcp.pop %v2649
        %v2725 = vmul.f32 1.0, %v2724
        %v2726 = vrcp.pop %v2650
        %v2727 = vmul.f32 1.0, %v2726
        %v2728 = vrcp.pop %v2651
        %v2729 = vmul.f32 1.0, %v2728
        %v2730 = vrcp.pop %v2652
        %v2731 = vmul.f32 1.0, %v2730
        %v2732 = vrcp.pop %v2653
        %v2733 = vmul.f32 1.0, %v2732
        %v2734 = vrcp.pop %v2654
        %v2735 = vmul.f32 1.0, %v2734
        %v2736 = vrcp.pop %v2655
        %v2737 = vmul.f32 1.0, %v2736
        %v2738 = vrcp.pop %v2656
        %v2739 = vmul.f32 1.0, %v2738
        %v2740 = vrcp.pop %v2657
        %v2741 = vmul.f32 1.0, %v2740
        %v2742 = vrcp.pop %v2658
        %v2743 = vmul.f32 1.0, %v2742
        %v2744 = vrcp.pop %v2659
        %v2745 = vmul.f32 1.0, %v2744
        %v2746 = vrcp.pop %v2660
        %v2747 = vmul.f32 1.0, %v2746
        %v2748 = vrcp.pop %v2661
        %v2749 = vmul.f32 1.0, %v2748
        %v2750 = vrcp.pop %v2662
        %v2751 = vmul.f32 1.0, %v2750
        %v2752 = vrcp.pop %v2663
        %v2753 = vmul.f32 1.0, %v2752
        %v2754 = vrcp.pop %v2664
        %v2755 = vmul.f32 1.0, %v2754
        %v2756 = vrcp.pop %v2665
        %v2757 = vmul.f32 1.0, %v2756
        %v2758 = vrcp.pop %v2666
        %v2759 = vmul.f32 1.0, %v2758
        %v2760 = vrcp.pop %v2667
        %v2761 = vmul.f32 1.0, %v2760
        %v2762 = vrcp.pop %v2668
        %v2763 = vmul.f32 1.0, %v2762
        %v2764 = vrcp.pop %v2669
        %v2765 = vmul.f32 1.0, %v2764
        %v2766 = vrcp.pop %v2670
        %v2767 = vmul.f32 1.0, %v2766
        %v2768 = vrcp.pop %v2671
        %v2769 = vmul.f32 1.0, %v2768
        %v2770 = vrcp.pop %v2672
        %v2771 = vmul.f32 1.0, %v2770
        %v2772 = vrcp.pop %v2673
        %v2773 = vmul.f32 1.0, %v2772
        %v2774 = vrcp.pop %v2674
        %v2775 = vmul.f32 1.0, %v2774
        %v2776 = vrcp.pop %v2675
        %v2777 = vmul.f32 1.0, %v2776
        %v2778 = vrcp.pop %v2676
        %v2779 = vmul.f32 1.0, %v2778
        %v2780 = vrcp.pop %v2677
        %v2781 = vmul.f32 1.0, %v2780
        %v2782 = vrcp.pop %v2678
        %v2783 = vmul.f32 1.0, %v2782
        %v2784 = vrcp.pop %v2679
        %v2785 = vmul.f32 1.0, %v2784
        %v2786 = vrcp.pop %v2680
        %v2787 = vmul.f32 1.0, %v2786
        %v2788 = vrcp.pop %v2681
        %v2789 = vmul.f32 1.0, %v2788
        %v2790 = vrcp.pop %v2682
        %v2791 = vmul.f32 1.0, %v2790
        %v2792 = vrcp.pop %v2683
        %v2793 = vmul.f32 1.0, %v2792
        %v2794 = vrcp.pop %v2684
        %v2795 = vmul.f32 1.0, %v2794
        %v2796 = vrcp.pop %v2685
        %v2797 = vmul.f32 1.0, %v2796
        %v2798 = vrcp.pop %v2686
        %v2799 = vmul.f32 1.0, %v2798
        %v2800 = vrcp.pop %v2687
        %v2801 = vmul.f32 1.0, %v2800
        %v2802 = vrcp.pop %v2688
        %v2803 = vmul.f32 1.0, %v2802
        %v2804 = vrcp.pop %v2689
        %v2805 = vmul.f32 1.0, %v2804
        %v2806 = vrcp.pop %v2690
        %v2807 = vmul.f32 1.0, %v2806
        %v2808 = vrcp.pop %v2691
        %v2809 = vmul.f32 1.0, %v2808
        %v2810 = vrcp.pop %v2692
        %v2811 = vmul.f32 1.0, %v2810
        %v2812 = vrcp.pop %v2693
        %v2813 = vmul.f32 1.0, %v2812
        %v2814 = vrcp.pop %v2694
        %v2815 = vmul.f32 1.0, %v2814
        %v2816 = vrcp.pop %v2695
        %v2817 = vmul.f32 1.0, %v2816
        %v2818 = vrcp.pop %v2696
        %v2819 = vmul.f32 1.0, %v2818
        %v2820 = vrcp.pop %v2697
        %v2821 = vmul.f32 1.0, %v2820
        %v2822 = vrcp.pop %v2698
        %v2823 = vmul.f32 1.0, %v2822
        %v2824 = vrcp.pop %v2699
        %v2825 = vmul.f32 1.0, %v2824
        %v2826 = vrcp.pop %v2700
        %v2827 = vmul.f32 1.0, %v2826
        %v2828 = vrcp.pop %v2701
        %v2829 = vmul.f32 1.0, %v2828
        %vm2830 = vcmask 97280
        %2831 = vst.msk [vmem:[%s329] sm:$0xff] %vm2830, %v2703
        %2832 = vst.msk [vmem:[%s329 + $0x8] sm:$0xff] %vm2830, %v2705
        %2833 = vst.msk [vmem:[%s329 + $0x10] sm:$0xff] %vm2830, %v2707
        %2834 = vst.msk [vmem:[%s329 + $0x18] sm:$0xff] %vm2830, %v2709
        %2835 = vst.msk [vmem:[%s329 + $0x20] sm:$0xff] %vm2830, %v2711
        %2836 = vst.msk [vmem:[%s329 + $0x28] sm:$0xff] %vm2830, %v2713
        %2837 = vst.msk [vmem:[%s329 + $0x30] sm:$0xff] %vm2830, %v2715
        %2838 = vst.msk [vmem:[%s329 + $0x38] sm:$0xff] %vm2830, %v2717
        %2839 = vst.msk [vmem:[%s329 + $0x40] sm:$0xff] %vm2830, %v2719
        %2840 = vst.msk [vmem:[%s329 + $0x48] sm:$0xff] %vm2830, %v2721
        %2841 = vst.msk [vmem:[%s329 + $0x50] sm:$0xff] %vm2830, %v2723
        %2842 = vst.msk [vmem:[%s329 + $0x58] sm:$0xff] %vm2830, %v2725
        %2843 = vst.msk [vmem:[%s329 + $0x60] sm:$0xff] %vm2830, %v2727
        %2844 = vst.msk [vmem:[%s329 + $0x68] sm:$0xff] %vm2830, %v2729
        %2845 = vst.msk [vmem:[%s329 + $0x70] sm:$0xff] %vm2830, %v2731
        %2846 = vst.msk [vmem:[%s329 + $0x78] sm:$0xff] %vm2830, %v2733
        %2847 = vst.msk [vmem:[%s329 + $0x80] sm:$0xff] %vm2830, %v2735
        %2848 = vst.msk [vmem:[%s329 + $0x88] sm:$0xff] %vm2830, %v2737
        %2849 = vst.msk [vmem:[%s329 + $0x90] sm:$0xff] %vm2830, %v2739
        %2850 = vst.msk [vmem:[%s329 + $0x98] sm:$0xff] %vm2830, %v2741
        %2851 = vst.msk [vmem:[%s329 + $0xa0] sm:$0xff] %vm2830, %v2743
        %2852 = vst.msk [vmem:[%s329 + $0xa8] sm:$0xff] %vm2830, %v2745
        %2853 = vst.msk [vmem:[%s329 + $0xb0] sm:$0xff] %vm2830, %v2747
        %2854 = vst.msk [vmem:[%s329 + $0xb8] sm:$0xff] %vm2830, %v2749
        %2855 = vst.msk [vmem:[%s329 + $0xc0] sm:$0xff] %vm2830, %v2751
        %2856 = vst.msk [vmem:[%s329 + $0xc8] sm:$0xff] %vm2830, %v2753
        %2857 = vst.msk [vmem:[%s329 + $0xd0] sm:$0xff] %vm2830, %v2755
        %2858 = vst.msk [vmem:[%s329 + $0xd8] sm:$0xff] %vm2830, %v2757
        %2859 = vst.msk [vmem:[%s329 + $0xe0] sm:$0xff] %vm2830, %v2759
        %2860 = vst.msk [vmem:[%s329 + $0xe8] sm:$0xff] %vm2830, %v2761
        %2861 = vst.msk [vmem:[%s329 + $0xf0] sm:$0xff] %vm2830, %v2763
        %2862 = vst.msk [vmem:[%s329 + $0xf8] sm:$0xff] %vm2830, %v2765
        %2863 = vst.msk [vmem:[%s329 + $0x100] sm:$0xff] %vm2830, %v2767
        %2864 = vst.msk [vmem:[%s329 + $0x108] sm:$0xff] %vm2830, %v2769
        %2865 = vst.msk [vmem:[%s329 + $0x110] sm:$0xff] %vm2830, %v2771
        %2866 = vst.msk [vmem:[%s329 + $0x118] sm:$0xff] %vm2830, %v2773
        %2867 = vst.msk [vmem:[%s329 + $0x120] sm:$0xff] %vm2830, %v2775
        %2868 = vst.msk [vmem:[%s329 + $0x128] sm:$0xff] %vm2830, %v2777
        %2869 = vst.msk [vmem:[%s329 + $0x130] sm:$0xff] %vm2830, %v2779
        %2870 = vst.msk [vmem:[%s329 + $0x138] sm:$0xff] %vm2830, %v2781
        %2871 = vst.msk [vmem:[%s329 + $0x140] sm:$0xff] %vm2830, %v2783
        %2872 = vst.msk [vmem:[%s329 + $0x148] sm:$0xff] %vm2830, %v2785
        %2873 = vst.msk [vmem:[%s329 + $0x150] sm:$0xff] %vm2830, %v2787
        %2874 = vst.msk [vmem:[%s329 + $0x158] sm:$0xff] %vm2830, %v2789
        %2875 = vst.msk [vmem:[%s329 + $0x160] sm:$0xff] %vm2830, %v2791
        %2876 = vst.msk [vmem:[%s329 + $0x168] sm:$0xff] %vm2830, %v2793
        %2877 = vst.msk [vmem:[%s329 + $0x170] sm:$0xff] %vm2830, %v2795
        %2878 = vst.msk [vmem:[%s329 + $0x178] sm:$0xff] %vm2830, %v2797
        %2879 = vst.msk [vmem:[%s329 + $0x180] sm:$0xff] %vm2830, %v2799
        %2880 = vst.msk [vmem:[%s329 + $0x188] sm:$0xff] %vm2830, %v2801
        %2881 = vst.msk [vmem:[%s329 + $0x190] sm:$0xff] %vm2830, %v2803
        %2882 = vst.msk [vmem:[%s329 + $0x198] sm:$0xff] %vm2830, %v2805
        %2883 = vst.msk [vmem:[%s329 + $0x1a0] sm:$0xff] %vm2830, %v2807
        %2884 = vst.msk [vmem:[%s329 + $0x1a8] sm:$0xff] %vm2830, %v2809
        %2885 = vst.msk [vmem:[%s329 + $0x1b0] sm:$0xff] %vm2830, %v2811
        %2886 = vst.msk [vmem:[%s329 + $0x1b8] sm:$0xff] %vm2830, %v2813
        %2887 = vst.msk [vmem:[%s329 + $0x1c0] sm:$0xff] %vm2830, %v2815
        %2888 = vst.msk [vmem:[%s329 + $0x1c8] sm:$0xff] %vm2830, %v2817
        %2889 = vst.msk [vmem:[%s329 + $0x1d0] sm:$0xff] %vm2830, %v2819
        %2890 = vst.msk [vmem:[%s329 + $0x1d8] sm:$0xff] %vm2830, %v2821
        %2891 = vst.msk [vmem:[%s329 + $0x1e0] sm:$0xff] %vm2830, %v2823
        %2892 = vst.msk [vmem:[%s329 + $0x1e8] sm:$0xff] %vm2830, %v2825
        %2893 = vst.msk [vmem:[%s329 + $0x1f0] sm:$0xff] %vm2830, %v2827
        %2894 = vst.msk [vmem:[%s329 + $0x1f8] sm:$0xff] %vm2830, %v2829
        %s2895 = smul.u32 64, %s22
        %p2896 = scmp.lt.s32.totalorder %s2895, 127
        %s2897 = scalar_select %p2896, %s2895, 127
        %s2898 = smul.addr %s2897, 8
        %s2899 = scalar_lea.vmem %s7, %s2898
        // Predicated region
        $region61: #{tpu_custom_call.1} parent=47 // pred_check
          %p2900 = pneg %p192
        $region62: #{tpu_custom_call.1} parent=47 // pred_check_branch
          %2902 = sbr.rel (%p2900) target = $region64
        $region63: #{tpu_custom_call.1} parent=47 // pred_region
          %s2903 = smul.u32 64, %s22
        $region64: #{tpu_custom_call.1} parent=47 // pred_fallthru
          _
      $region48: #{tpu_custom_call.1} parent=5 // pred_fallthru
        _
      %p2904 = scmp.le.s32.totalorder 2, %s17
      // Predicated region
      $region65: #{tpu_custom_call.1} parent=5 // pred_check
        %p2905 = pneg %p2904
      $region66: #{tpu_custom_call.1} parent=5 // pred_check_branch
        %2907 = sbr.rel (%p2905) target = $region68
      $region67: #{tpu_custom_call.1} parent=5 // pred_region
        %s2908 = ssub.s32 %s17, 2
        // Predicated region
        $region69: #{tpu_custom_call.1} parent=67 // pred_check
          %p2909 = pneg %p198
        $region70: #{tpu_custom_call.1} parent=67 // pred_check_branch
          %2911 = sbr.rel (%p2909) target = $region72
        $region71: #{tpu_custom_call.1} parent=67 // pred_region
          %s2912 = smul.u32 64, %s23
          %p2913 = scmp.lt.s32.totalorder %s2912, 127
          %s2914 = scalar_select %p2913, %s2912, 127
          %s2915 = smul.addr %s2914, 8
          %s2916 = scalar_lea.vmem %s7, %s2915
        $region72: #{tpu_custom_call.1} parent=67 // pred_fallthru
          _
      $region68: #{tpu_custom_call.1} parent=5 // pred_fallthru
        _
    $region6: #{tpu_custom_call.1} parent=1 // loop_footer
      %s21 = sadd.s32 1, %s17
    $region7: #{tpu_custom_call.1} parent=1 // loop_footer_branch
      %16 = sbr.rel target = $region3
    $region8: #{tpu_custom_call.1} parent=1 // loop_exit
      _
    %2917 = vsyncpa [#allocation3], 1
    %s2918 = scalar_lea.sflag [#allocation3], 1
    %2919 = vsyncpa %s2918, 1
    %2920 = vsyncpa [#allocation5], 1

</llo_original>
